<compile_context>
chip_gen: v6e
topology: v6e:2x2x1
jax: 0.10.0
libtpu: 0.0.40
codegen_flags: <defaults>
</compile_context>

<pallas_src>
import numpy as np
import jax
import jax.numpy as jnp
from jax.experimental import pallas as pl
from jax.experimental.pallas import tpu as pltpu

# ---- config (hidden_size = [64, 64]) -------------------------------------
NUM_INPUTS = 16
NUM_OUTPUTS = 4
NUM_ATOMS = 51
A_PAD = 128                      # per-action atom block padded to one lane group
ADV_W = NUM_OUTPUTS * A_PAD      # 512
H0 = 64                          # hidden_size[0] (feature net width)
H1 = 64                          # hidden_size[1] (value / advantage hidden width)
NOISE_STD = 0.5
BATCH = 64
LN_EPS = 1e-5
V_MIN, V_MAX = -10.0, 10.0


def _round_up(n, m):
    return ((n + m - 1) // m) * m


# ---------------------------------------------------------------------------
# Kernel
# ---------------------------------------------------------------------------
def rainbow_mlp_kernel(
    x_ref,
    wf_ref, bf_ref, gf_ref, bef_ref,                          # feature net
    wv1_ref, bv1_ref, gv1_ref, bev1_ref, wvo_ref, bvo_ref,    # value net
    wa1_ref, ba1_ref, ga1_ref, bea1_ref, wao_ref, bao_ref,    # advantage net
    s_supp_ref, s_one_ref,                                    # expectation matrices
    q_ref,                                                    # out (Tb, num_outputs)
):
    x = x_ref[...]                                            # (Tb, Din) f32

    def lin_ln_relu(h, w_ref, b_ref, g_ref, be_ref):
        # MXU in bf16 (weights already bf16), f32 accumulate + f32 VPU math.
        z = jnp.dot(h.astype(jnp.bfloat16), w_ref[...],
                    preferred_element_type=jnp.float32) + b_ref[...]
        n = z.shape[-1]
        mu = jnp.mean(z, axis=-1, keepdims=True)
        ms = jnp.mean(z * z, axis=-1, keepdims=True)
        var = ms - mu * mu                        # one-pass biased variance
        zn = (z - mu) * jax.lax.rsqrt(var + LN_EPS)
        return jnp.maximum(zn * g_ref[...] + be_ref[...], 0.0)

    # feature_net: Linear -> LayerNorm -> ReLU
    h = lin_ln_relu(x, wf_ref, bf_ref, gf_ref, bef_ref)          # (Tb, H0)
    # value / advantage hidden layers
    hv = lin_ln_relu(h, wv1_ref, bv1_ref, gv1_ref, bev1_ref)     # (Tb, H1)
    ha = lin_ln_relu(h, wa1_ref, ba1_ref, ga1_ref, bea1_ref)     # (Tb, H1)

    # output layers: one fused, lane-aligned matmul each (atom blocks padded to 128)
    value = jnp.dot(hv.astype(jnp.bfloat16), wvo_ref[...],
                    preferred_element_type=jnp.float32) + bvo_ref[...]   # (Tb, 128)
    adv = jnp.dot(ha.astype(jnp.bfloat16), wao_ref[...],
                  preferred_element_type=jnp.float32) + bao_ref[...]     # (Tb, 512)

    # per-atom mean over the 4 actions (all slices 128-lane aligned -> free)
    adv_mean = adv[:, 0:A_PAD]
    for o in range(1, NUM_OUTPUTS):
        adv_mean = adv_mean + adv[:, o * A_PAD:(o + 1) * A_PAD]
    adv_mean = adv_mean * (1.0 / NUM_OUTPUTS)                    # (Tb, 128)

    # dueling combine: logits = adv + (value - adv_mean) tiled across actions
    c = value - adv_mean                                         # (Tb, 128)
    logits = adv + jnp.concatenate([c] * NUM_OUTPUTS, axis=-1)   # (Tb, 512)

    # static mask: pad lanes (atom index >= 51 within each 128-lane block) -> -1e30
    atom = jax.lax.broadcasted_iota(jnp.int32, (1, ADV_W), 1) % A_PAD
    logits = jnp.where(atom < NUM_ATOMS, logits, -1e30)

    # one global row max (same constant for every 128-lane block of the row,
    # so each block's softmax is unchanged and numerically stable)
    m = jnp.max(logits, axis=-1, keepdims=True)
    e = jnp.exp(logits - m)                                      # pad lanes -> 0

    # softmax normalization + expectation as two tiny MXU contractions
    num = jnp.dot(e, s_supp_ref[...], preferred_element_type=jnp.float32)  # (Tb, 4)
    den = jnp.dot(e, s_one_ref[...], preferred_element_type=jnp.float32)   # (Tb, 4)
    q_ref[...] = num * pl.reciprocal(den, approx=True)


# ---------------------------------------------------------------------------
# Wrapper: batch grid, resident weights
# ---------------------------------------------------------------------------
_PARAM_NAMES = (
    "wf", "bf", "gf", "bef",
    "wv1", "bv1", "gv1", "bev1", "wvo", "bvo",
    "wa1", "ba1", "ga1", "bea1", "wao", "bao",
    "s_supp", "s_one",
)


def evolvable_mlp_forward(x, packed, tile_b=256):
    x = x.astype(jnp.float32)
    B = x.shape[0]
    tile_b = max(8, _round_up(tile_b, 8))
    TILE_B = min(tile_b, _round_up(B, 8))
    B_pad = _round_up(B, TILE_B)
    if B_pad != B:
        x = jnp.pad(x, ((0, B_pad - B), (0, 0)))
    nb = B_pad // TILE_B

    param_args = [packed[n] for n in _PARAM_NAMES]

    x_spec = pl.BlockSpec((TILE_B, NUM_INPUTS), lambda i: (i, 0))
    # weights / biases / expectation matrices: full-array blocks, grid-invariant
    # index_map -> stay VMEM-resident across the batch grid.
    resident = lambda a: pl.BlockSpec(a.shape, lambda i: (0, 0))
    in_specs = [x_spec] + [resident(a) for a in param_args]
    out_spec = pl.BlockSpec((TILE_B, NUM_OUTPUTS), lambda i: (i, 0))

    q = pl.pallas_call(
        rainbow_mlp_kernel,
        out_shape=jax.ShapeDtypeStruct((B_pad, NUM_OUTPUTS), jnp.float32),
        grid=(nb,),
        in_specs=in_specs,
        out_specs=out_spec,
        compiler_params=pltpu.CompilerParams(
            dimension_semantics=("parallel",)),   # megacore-shard the batch axis
    )(x, *param_args)
    return q[:B]


# ---------------------------------------------------------------------------
# Deterministic parameter construction (natural, f32, PyTorch-equivalent)
# ---------------------------------------------------------------------------
def init_params(key):
    ks = jax.random.split(key, 12)

    def linear_w(k, fan_in, fan_out, gain=np.sqrt(2.0)):
        # deterministic stand-in for orthogonal_(std=sqrt(2))
        return (jax.random.normal(k, (fan_in, fan_out), jnp.float32)
                * (gain / np.sqrt(fan_in)))

    def noisy_w(k, fan_in, fan_out, vanish=False):
        kmu, ksig, keps = jax.random.split(k, 3)
        w_mu = linear_w(kmu, fan_in, fan_out)
        w_sigma = (jax.random.normal(ksig, (fan_in, fan_out), jnp.float32)
                   * (NOISE_STD / np.sqrt(fan_in)))
        eps = jax.random.normal(keps, (fan_in, fan_out), jnp.float32)
        w = w_mu + w_sigma * eps
        if vanish:  # output_vanish: mu and sigma both scaled by 0.1
            w = w * 0.1
        return w

    zeros = lambda n: jnp.zeros((1, n), jnp.float32)
    ones = lambda n: jnp.ones((1, n), jnp.float32)

    return {
        "wf": linear_w(ks[0], NUM_INPUTS, H0), "bf": zeros(H0),
        "gf": ones(H0), "bef": zeros(H0),
        "wv1": noisy_w(ks[1], H0, H1), "bv1": zeros(H1),
        "gv1": ones(H1), "bev1": zeros(H1),
        "wvo": noisy_w(ks[2], H1, NUM_ATOMS, vanish=True), "bvo": zeros(NUM_ATOMS),
        "wa1": noisy_w(ks[3], H0, H1), "ba1": zeros(H1),
        "ga1": ones(H1), "bea1": zeros(H1),
        "wao": noisy_w(ks[4], H1, NUM_OUTPUTS * NUM_ATOMS, vanish=True),
        "bao": zeros(NUM_OUTPUTS * NUM_ATOMS),
    }


def pack_params(params, support_row):
    """Host-side layout prep: pad atom blocks to 128 lanes, cast MXU weights to
    bf16, and build block-diagonal expectation matrices."""
    A, O, pad = NUM_ATOMS, NUM_OUTPUTS, A_PAD - NUM_ATOMS
    to_bf16 = lambda w: w.astype(jnp.bfloat16)

    wvo_p = jnp.pad(params["wvo"], ((0, 0), (0, pad)))
    bvo_p = jnp.pad(params["bvo"], ((0, 0), (0, pad)))
    wao_p = jnp.pad(params["wao"].reshape(H1, O, A),
                    ((0, 0), (0, 0), (0, pad))).reshape(H1, ADV_W)
    bao_p = jnp.pad(params["bao"].reshape(1, O, A),
                    ((0, 0), (0, 0), (0, pad))).reshape(1, ADV_W)

    sup = np.asarray(support_row, np.float32).reshape(-1)
    s_supp = np.zeros((ADV_W, O), np.float32)
    s_one = np.zeros((ADV_W, O), np.float32)
    for o in range(O):
        s_supp[o * A_PAD:o * A_PAD + A, o] = sup
        s_one[o * A_PAD:o * A_PAD + A, o] = 1.0

    return {
        "wf": to_bf16(params["wf"]), "bf": params["bf"],
        "gf": params["gf"], "bef": params["bef"],
        "wv1": to_bf16(params["wv1"]), "bv1": params["bv1"],
        "gv1": params["gv1"], "bev1": params["bev1"],
        "wvo": to_bf16(wvo_p), "bvo": bvo_p,
        "wa1": to_bf16(params["wa1"]), "ba1": params["ba1"],
        "ga1": params["ga1"], "bea1": params["bea1"],
        "wao": to_bf16(wao_p), "bao": bao_p,
        "s_supp": jnp.asarray(s_supp), "s_one": jnp.asarray(s_one),
    }


# ---------------------------------------------------------------------------
# Plain-JAX reference (same bf16-MXU / f32-accumulate precision policy)
# ---------------------------------------------------------------------------
def reference_forward(x, params, support_row):
    def mm(a, w):
        return jnp.dot(a.astype(jnp.bfloat16), w.astype(jnp.bfloat16),
                       preferred_element_type=jnp.float32)

    def lin_ln_relu(h, w, b, g, be):
        z = mm(h, w) + b
        mu = z.mean(-1, keepdims=True)
        var = jnp.mean(jnp.square(z - mu), axis=-1, keepdims=True)
        return jnp.maximum((z - mu) / jnp.sqrt(var + LN_EPS) * g + be, 0.0)

    h = lin_ln_relu(x, params["wf"], params["bf"], params["gf"], params["bef"])
    hv = lin_ln_relu(h, params["wv1"], params["bv1"], params["gv1"], params["bev1"])
    value = mm(hv, params["wvo"]) + params["bvo"]
    ha = lin_ln_relu(h, params["wa1"], params["ba1"], params["ga1"], params["bea1"])
    adv = mm(ha, params["wao"]) + params["bao"]
    b = x.shape[0]
    value = value.reshape(b, 1, NUM_ATOMS)
    adv = adv.reshape(b, NUM_OUTPUTS, NUM_ATOMS)
    logits = value + adv - adv.mean(1, keepdims=True)
    p = jax.nn.softmax(logits, axis=2)
    return jnp.sum(p * support_row.reshape(1, 1, NUM_ATOMS), axis=2)


if __name__ == "__main__":
    key = jax.random.PRNGKey(0)
    k_x, k_p = jax.random.split(key)

    x = jax.random.normal(k_x, (BATCH, NUM_INPUTS), jnp.float32)
    params = init_params(k_p)
    support_row = jnp.linspace(V_MIN, V_MAX, NUM_ATOMS,
                               dtype=jnp.float32).reshape(1, NUM_ATOMS)
    packed = pack_params(params, support_row)

    fwd = jax.jit(evolvable_mlp_forward, static_argnames=("tile_b",))
    q = fwd(x, packed, tile_b=32)          # grid = (2,), parallel over batch tiles
    q = jax.block_until_ready(q)

    q_ref = reference_forward(x, params, support_row)
    assert q.shape == (BATCH, NUM_OUTPUTS), q.shape
    # Tolerance accounts for bf16 MXU operands, one-pass LayerNorm variance and
    # the approximate (EUP) reciprocal; structural bugs would show errors >> 1e-2.
    np.testing.assert_allclose(np.asarray(q), np.asarray(q_ref), rtol=5e-3, atol=5e-3)

    print("KERNEL_OK")
</pallas_src>

<mosaic_0001>
module attributes {stable_mosaic.version = 11 : i64} {
  func.func @rainbow_mlp_kernel(%arg0: i32, %arg1: memref<32x16xf32, #tpu.memory_space<vmem>>, %arg2: memref<16x64xbf16, #tpu.memory_space<vmem>>, %arg3: memref<1x64xf32, #tpu.memory_space<vmem>>, %arg4: memref<1x64xf32, #tpu.memory_space<vmem>>, %arg5: memref<1x64xf32, #tpu.memory_space<vmem>>, %arg6: memref<64x64xbf16, #tpu.memory_space<vmem>>, %arg7: memref<1x64xf32, #tpu.memory_space<vmem>>, %arg8: memref<1x64xf32, #tpu.memory_space<vmem>>, %arg9: memref<1x64xf32, #tpu.memory_space<vmem>>, %arg10: memref<64x128xbf16, #tpu.memory_space<vmem>>, %arg11: memref<1x128xf32, #tpu.memory_space<vmem>>, %arg12: memref<64x64xbf16, #tpu.memory_space<vmem>>, %arg13: memref<1x64xf32, #tpu.memory_space<vmem>>, %arg14: memref<1x64xf32, #tpu.memory_space<vmem>>, %arg15: memref<1x64xf32, #tpu.memory_space<vmem>>, %arg16: memref<64x512xbf16, #tpu.memory_space<vmem>>, %arg17: memref<1x512xf32, #tpu.memory_space<vmem>>, %arg18: memref<512x4xf32, #tpu.memory_space<vmem>>, %arg19: memref<512x4xf32, #tpu.memory_space<vmem>>, %arg20: memref<32x4xf32, #tpu.memory_space<vmem>>) attributes {dimension_semantics = [#tpu.dimension_semantics<parallel>], iteration_bounds = array<i64: 2>, scalar_prefetch = 0 : i64, scratch_operands = 0 : i64, tpu.core_type = #tpu.core_type<tc>, window_params = [{transform_indices = @transform_0, window_bounds = array<i64: 32, 16>}, {pipeline_mode = #tpu.pipeline_mode<synchronous>, transform_indices = @transform_1, window_bounds = array<i64: 16, 64>}, {pipeline_mode = #tpu.pipeline_mode<synchronous>, transform_indices = @transform_2, window_bounds = array<i64: 1, 64>}, {pipeline_mode = #tpu.pipeline_mode<synchronous>, transform_indices = @transform_3, window_bounds = array<i64: 1, 64>}, {pipeline_mode = #tpu.pipeline_mode<synchronous>, transform_indices = @transform_4, window_bounds = array<i64: 1, 64>}, {pipeline_mode = #tpu.pipeline_mode<synchronous>, transform_indices = @transform_5, window_bounds = array<i64: 64, 64>}, {pipeline_mode = #tpu.pipeline_mode<synchronous>, transform_indices = @transform_6, window_bounds = array<i64: 1, 64>}, {pipeline_mode = #tpu.pipeline_mode<synchronous>, transform_indices = @transform_7, window_bounds = array<i64: 1, 64>}, {pipeline_mode = #tpu.pipeline_mode<synchronous>, transform_indices = @transform_8, window_bounds = array<i64: 1, 64>}, {pipeline_mode = #tpu.pipeline_mode<synchronous>, transform_indices = @transform_9, window_bounds = array<i64: 64, 128>}, {pipeline_mode = #tpu.pipeline_mode<synchronous>, transform_indices = @transform_10, window_bounds = array<i64: 1, 128>}, {pipeline_mode = #tpu.pipeline_mode<synchronous>, transform_indices = @transform_11, window_bounds = array<i64: 64, 64>}, {pipeline_mode = #tpu.pipeline_mode<synchronous>, transform_indices = @transform_12, window_bounds = array<i64: 1, 64>}, {pipeline_mode = #tpu.pipeline_mode<synchronous>, transform_indices = @transform_13, window_bounds = array<i64: 1, 64>}, {pipeline_mode = #tpu.pipeline_mode<synchronous>, transform_indices = @transform_14, window_bounds = array<i64: 1, 64>}, {pipeline_mode = #tpu.pipeline_mode<synchronous>, transform_indices = @transform_15, window_bounds = array<i64: 64, 512>}, {pipeline_mode = #tpu.pipeline_mode<synchronous>, transform_indices = @transform_16, window_bounds = array<i64: 1, 512>}, {pipeline_mode = #tpu.pipeline_mode<synchronous>, transform_indices = @transform_17, window_bounds = array<i64: 512, 4>}, {pipeline_mode = #tpu.pipeline_mode<synchronous>, transform_indices = @transform_18, window_bounds = array<i64: 512, 4>}, {transform_indices = @transform_19, window_bounds = array<i64: 32, 4>}]} {
    %c0 = arith.constant 0 : index
    %c0_0 = arith.constant 0 : index
    %0 = vector.load %arg1[%c0, %c0_0] : memref<32x16xf32, #tpu.memory_space<vmem>>, vector<32x16xf32>
    %1 = arith.truncf %0 : vector<32x16xf32> to vector<32x16xbf16>
    %c0_1 = arith.constant 0 : index
    %c0_2 = arith.constant 0 : index
    %2 = vector.load %arg2[%c0_1, %c0_2] : memref<16x64xbf16, #tpu.memory_space<vmem>>, vector<16x64xbf16>
    %cst = arith.constant dense<0.000000e+00> : vector<32x64xf32>
    %3 = tpu.matmul %1, %2, %cst {dimension_numbers = #tpu.dot_dimension_numbers<[1], [0], [0], [1], [0, 0, 1, 1], [], []>} : vector<32x16xbf16>, vector<16x64xbf16>, vector<32x64xf32> -> vector<32x64xf32>
    %c0_3 = arith.constant 0 : index
    %c0_4 = arith.constant 0 : index
    %4 = vector.load %arg3[%c0_3, %c0_4] : memref<1x64xf32, #tpu.memory_space<vmem>>, vector<1x64xf32>
    %5 = vector.broadcast %4 : vector<1x64xf32> to vector<32x64xf32>
    %6 = arith.addf %3, %5 : vector<32x64xf32>
    %cst_5 = arith.constant dense<0.000000e+00> : vector<32xf32>
    %7 = vector.multi_reduction <add>, %6, %cst_5 [1] : vector<32x64xf32> to vector<32xf32>
    %8 = vector.shape_cast %7 : vector<32xf32> to vector<32x1xf32>
    %cst_6 = arith.constant 6.400000e+01 : f32
    %9 = vector.broadcast %cst_6 : f32 to vector<32x1xf32>
    %10 = arith.divf %8, %9 : vector<32x1xf32>
    %11 = arith.mulf %6, %6 : vector<32x64xf32>
    %cst_7 = arith.constant dense<0.000000e+00> : vector<32xf32>
    %12 = vector.multi_reduction <add>, %11, %cst_7 [1] : vector<32x64xf32> to vector<32xf32>
    %13 = vector.shape_cast %12 : vector<32xf32> to vector<32x1xf32>
    %cst_8 = arith.constant 6.400000e+01 : f32
    %14 = vector.broadcast %cst_8 : f32 to vector<32x1xf32>
    %15 = arith.divf %13, %14 : vector<32x1xf32>
    %16 = arith.mulf %10, %10 : vector<32x1xf32>
    %17 = arith.subf %15, %16 : vector<32x1xf32>
    %18 = vector.broadcast %10 : vector<32x1xf32> to vector<32x64xf32>
    %19 = arith.subf %6, %18 : vector<32x64xf32>
    %cst_9 = arith.constant 9.99999974E-6 : f32
    %20 = vector.broadcast %cst_9 : f32 to vector<32x1xf32>
    %21 = arith.addf %17, %20 : vector<32x1xf32>
    %22 = math.rsqrt %21 : vector<32x1xf32>
    %23 = vector.broadcast %22 : vector<32x1xf32> to vector<32x64xf32>
    %24 = arith.mulf %19, %23 : vector<32x64xf32>
    %c0_10 = arith.constant 0 : index
    %c0_11 = arith.constant 0 : index
    %25 = vector.load %arg4[%c0_10, %c0_11] : memref<1x64xf32, #tpu.memory_space<vmem>>, vector<1x64xf32>
    %26 = vector.broadcast %25 : vector<1x64xf32> to vector<32x64xf32>
    %27 = arith.mulf %24, %26 : vector<32x64xf32>
    %c0_12 = arith.constant 0 : index
    %c0_13 = arith.constant 0 : index
    %28 = vector.load %arg5[%c0_12, %c0_13] : memref<1x64xf32, #tpu.memory_space<vmem>>, vector<1x64xf32>
    %29 = vector.broadcast %28 : vector<1x64xf32> to vector<32x64xf32>
    %30 = arith.addf %27, %29 : vector<32x64xf32>
    %cst_14 = arith.constant 0.000000e+00 : f32
    %31 = vector.broadcast %cst_14 : f32 to vector<32x64xf32>
    %32 = arith.maximumf %30, %31 : vector<32x64xf32>
    %33 = arith.truncf %32 : vector<32x64xf32> to vector<32x64xbf16>
    %c0_15 = arith.constant 0 : index
    %c0_16 = arith.constant 0 : index
    %34 = vector.load %arg6[%c0_15, %c0_16] : memref<64x64xbf16, #tpu.memory_space<vmem>>, vector<64x64xbf16>
    %cst_17 = arith.constant dense<0.000000e+00> : vector<32x64xf32>
    %35 = tpu.matmul %33, %34, %cst_17 {dimension_numbers = #tpu.dot_dimension_numbers<[1], [0], [0], [1], [0, 0, 1, 1], [], []>} : vector<32x64xbf16>, vector<64x64xbf16>, vector<32x64xf32> -> vector<32x64xf32>
    %c0_18 = arith.constant 0 : index
    %c0_19 = arith.constant 0 : index
    %36 = vector.load %arg7[%c0_18, %c0_19] : memref<1x64xf32, #tpu.memory_space<vmem>>, vector<1x64xf32>
    %37 = vector.broadcast %36 : vector<1x64xf32> to vector<32x64xf32>
    %38 = arith.addf %35, %37 : vector<32x64xf32>
    %cst_20 = arith.constant dense<0.000000e+00> : vector<32xf32>
    %39 = vector.multi_reduction <add>, %38, %cst_20 [1] : vector<32x64xf32> to vector<32xf32>
    %40 = vector.shape_cast %39 : vector<32xf32> to vector<32x1xf32>
    %cst_21 = arith.constant 6.400000e+01 : f32
    %41 = vector.broadcast %cst_21 : f32 to vector<32x1xf32>
    %42 = arith.divf %40, %41 : vector<32x1xf32>
    %43 = arith.mulf %38, %38 : vector<32x64xf32>
    %cst_22 = arith.constant dense<0.000000e+00> : vector<32xf32>
    %44 = vector.multi_reduction <add>, %43, %cst_22 [1] : vector<32x64xf32> to vector<32xf32>
    %45 = vector.shape_cast %44 : vector<32xf32> to vector<32x1xf32>
    %cst_23 = arith.constant 6.400000e+01 : f32
    %46 = vector.broadcast %cst_23 : f32 to vector<32x1xf32>
    %47 = arith.divf %45, %46 : vector<32x1xf32>
    %48 = arith.mulf %42, %42 : vector<32x1xf32>
    %49 = arith.subf %47, %48 : vector<32x1xf32>
    %50 = vector.broadcast %42 : vector<32x1xf32> to vector<32x64xf32>
    %51 = arith.subf %38, %50 : vector<32x64xf32>
    %cst_24 = arith.constant 9.99999974E-6 : f32
    %52 = vector.broadcast %cst_24 : f32 to vector<32x1xf32>
    %53 = arith.addf %49, %52 : vector<32x1xf32>
    %54 = math.rsqrt %53 : vector<32x1xf32>
    %55 = vector.broadcast %54 : vector<32x1xf32> to vector<32x64xf32>
    %56 = arith.mulf %51, %55 : vector<32x64xf32>
    %c0_25 = arith.constant 0 : index
    %c0_26 = arith.constant 0 : index
    %57 = vector.load %arg8[%c0_25, %c0_26] : memref<1x64xf32, #tpu.memory_space<vmem>>, vector<1x64xf32>
    %58 = vector.broadcast %57 : vector<1x64xf32> to vector<32x64xf32>
    %59 = arith.mulf %56, %58 : vector<32x64xf32>
    %c0_27 = arith.constant 0 : index
    %c0_28 = arith.constant 0 : index
    %60 = vector.load %arg9[%c0_27, %c0_28] : memref<1x64xf32, #tpu.memory_space<vmem>>, vector<1x64xf32>
    %61 = vector.broadcast %60 : vector<1x64xf32> to vector<32x64xf32>
    %62 = arith.addf %59, %61 : vector<32x64xf32>
    %cst_29 = arith.constant 0.000000e+00 : f32
    %63 = vector.broadcast %cst_29 : f32 to vector<32x64xf32>
    %64 = arith.maximumf %62, %63 : vector<32x64xf32>
    %65 = arith.truncf %32 : vector<32x64xf32> to vector<32x64xbf16>
    %c0_30 = arith.constant 0 : index
    %c0_31 = arith.constant 0 : index
    %66 = vector.load %arg12[%c0_30, %c0_31] : memref<64x64xbf16, #tpu.memory_space<vmem>>, vector<64x64xbf16>
    %cst_32 = arith.constant dense<0.000000e+00> : vector<32x64xf32>
    %67 = tpu.matmul %65, %66, %cst_32 {dimension_numbers = #tpu.dot_dimension_numbers<[1], [0], [0], [1], [0, 0, 1, 1], [], []>} : vector<32x64xbf16>, vector<64x64xbf16>, vector<32x64xf32> -> vector<32x64xf32>
    %c0_33 = arith.constant 0 : index
    %c0_34 = arith.constant 0 : index
    %68 = vector.load %arg13[%c0_33, %c0_34] : memref<1x64xf32, #tpu.memory_space<vmem>>, vector<1x64xf32>
    %69 = vector.broadcast %68 : vector<1x64xf32> to vector<32x64xf32>
    %70 = arith.addf %67, %69 : vector<32x64xf32>
    %cst_35 = arith.constant dense<0.000000e+00> : vector<32xf32>
    %71 = vector.multi_reduction <add>, %70, %cst_35 [1] : vector<32x64xf32> to vector<32xf32>
    %72 = vector.shape_cast %71 : vector<32xf32> to vector<32x1xf32>
    %cst_36 = arith.constant 6.400000e+01 : f32
    %73 = vector.broadcast %cst_36 : f32 to vector<32x1xf32>
    %74 = arith.divf %72, %73 : vector<32x1xf32>
    %75 = arith.mulf %70, %70 : vector<32x64xf32>
    %cst_37 = arith.constant dense<0.000000e+00> : vector<32xf32>
    %76 = vector.multi_reduction <add>, %75, %cst_37 [1] : vector<32x64xf32> to vector<32xf32>
    %77 = vector.shape_cast %76 : vector<32xf32> to vector<32x1xf32>
    %cst_38 = arith.constant 6.400000e+01 : f32
    %78 = vector.broadcast %cst_38 : f32 to vector<32x1xf32>
    %79 = arith.divf %77, %78 : vector<32x1xf32>
    %80 = arith.mulf %74, %74 : vector<32x1xf32>
    %81 = arith.subf %79, %80 : vector<32x1xf32>
    %82 = vector.broadcast %74 : vector<32x1xf32> to vector<32x64xf32>
    %83 = arith.subf %70, %82 : vector<32x64xf32>
    %cst_39 = arith.constant 9.99999974E-6 : f32
    %84 = vector.broadcast %cst_39 : f32 to vector<32x1xf32>
    %85 = arith.addf %81, %84 : vector<32x1xf32>
    %86 = math.rsqrt %85 : vector<32x1xf32>
    %87 = vector.broadcast %86 : vector<32x1xf32> to vector<32x64xf32>
    %88 = arith.mulf %83, %87 : vector<32x64xf32>
    %c0_40 = arith.constant 0 : index
    %c0_41 = arith.constant 0 : index
    %89 = vector.load %arg14[%c0_40, %c0_41] : memref<1x64xf32, #tpu.memory_space<vmem>>, vector<1x64xf32>
    %90 = vector.broadcast %89 : vector<1x64xf32> to vector<32x64xf32>
    %91 = arith.mulf %88, %90 : vector<32x64xf32>
    %c0_42 = arith.constant 0 : index
    %c0_43 = arith.constant 0 : index
    %92 = vector.load %arg15[%c0_42, %c0_43] : memref<1x64xf32, #tpu.memory_space<vmem>>, vector<1x64xf32>
    %93 = vector.broadcast %92 : vector<1x64xf32> to vector<32x64xf32>
    %94 = arith.addf %91, %93 : vector<32x64xf32>
    %cst_44 = arith.constant 0.000000e+00 : f32
    %95 = vector.broadcast %cst_44 : f32 to vector<32x64xf32>
    %96 = arith.maximumf %94, %95 : vector<32x64xf32>
    %97 = arith.truncf %64 : vector<32x64xf32> to vector<32x64xbf16>
    %c0_45 = arith.constant 0 : index
    %c0_46 = arith.constant 0 : index
    %98 = vector.load %arg10[%c0_45, %c0_46] : memref<64x128xbf16, #tpu.memory_space<vmem>>, vector<64x128xbf16>
    %cst_47 = arith.constant dense<0.000000e+00> : vector<32x128xf32>
    %99 = tpu.matmul %97, %98, %cst_47 {dimension_numbers = #tpu.dot_dimension_numbers<[1], [0], [0], [1], [0, 0, 1, 1], [], []>} : vector<32x64xbf16>, vector<64x128xbf16>, vector<32x128xf32> -> vector<32x128xf32>
    %c0_48 = arith.constant 0 : index
    %c0_49 = arith.constant 0 : index
    %100 = vector.load %arg11[%c0_48, %c0_49] : memref<1x128xf32, #tpu.memory_space<vmem>>, vector<1x128xf32>
    %101 = vector.broadcast %100 : vector<1x128xf32> to vector<32x128xf32>
    %102 = arith.addf %99, %101 : vector<32x128xf32>
    %103 = arith.truncf %96 : vector<32x64xf32> to vector<32x64xbf16>
    %c0_50 = arith.constant 0 : index
    %c0_51 = arith.constant 0 : index
    %104 = vector.load %arg16[%c0_50, %c0_51] : memref<64x512xbf16, #tpu.memory_space<vmem>>, vector<64x512xbf16>
    %cst_52 = arith.constant dense<0.000000e+00> : vector<32x512xf32>
    %105 = tpu.matmul %103, %104, %cst_52 {dimension_numbers = #tpu.dot_dimension_numbers<[1], [0], [0], [1], [0, 0, 1, 1], [], []>} : vector<32x64xbf16>, vector<64x512xbf16>, vector<32x512xf32> -> vector<32x512xf32>
    %c0_53 = arith.constant 0 : index
    %c0_54 = arith.constant 0 : index
    %106 = vector.load %arg17[%c0_53, %c0_54] : memref<1x512xf32, #tpu.memory_space<vmem>>, vector<1x512xf32>
    %107 = vector.broadcast %106 : vector<1x512xf32> to vector<32x512xf32>
    %108 = arith.addf %105, %107 : vector<32x512xf32>
    %109 = vector.extract_strided_slice %108 {offsets = [0, 0], sizes = [32, 128], strides = [1, 1]} : vector<32x512xf32> to vector<32x128xf32>
    %110 = vector.extract_strided_slice %108 {offsets = [0, 128], sizes = [32, 128], strides = [1, 1]} : vector<32x512xf32> to vector<32x128xf32>
    %111 = arith.addf %109, %110 : vector<32x128xf32>
    %112 = vector.extract_strided_slice %108 {offsets = [0, 256], sizes = [32, 128], strides = [1, 1]} : vector<32x512xf32> to vector<32x128xf32>
    %113 = arith.addf %111, %112 : vector<32x128xf32>
    %114 = vector.extract_strided_slice %108 {offsets = [0, 384], sizes = [32, 128], strides = [1, 1]} : vector<32x512xf32> to vector<32x128xf32>
    %115 = arith.addf %113, %114 : vector<32x128xf32>
    %cst_55 = arith.constant 2.500000e-01 : f32
    %116 = vector.broadcast %cst_55 : f32 to vector<32x128xf32>
    %117 = arith.mulf %115, %116 : vector<32x128xf32>
    %118 = arith.subf %102, %117 : vector<32x128xf32>
    %119 = tpu.concatenate %118, %118, %118, %118 in 1 : vector<32x128xf32>, vector<32x128xf32>, vector<32x128xf32>, vector<32x128xf32> -> vector<32x512xf32>
    %120 = arith.addf %108, %119 : vector<32x512xf32>
    %121 = tpu.iota {dimensions = array<i32: 1>} : vector<1x512xi32>
    %c128_i32 = arith.constant 128 : i32
    %c0_i32 = arith.constant 0 : i32
    %122 = arith.cmpi eq, %c128_i32, %c0_i32 : i32
    %c1_i32 = arith.constant 1 : i32
    %123 = arith.select %122, %c1_i32, %c128_i32 : i32
    %124 = vector.broadcast %123 : i32 to vector<1x512xi32>
    %125 = arith.remsi %121, %124 : vector<1x512xi32>
    %c0_i32_56 = arith.constant 0 : i32
    %126 = vector.broadcast %c0_i32_56 : i32 to vector<1x512xi32>
    %127 = arith.cmpi ne, %125, %126 : vector<1x512xi32>
    %c0_i32_57 = arith.constant 0 : i32
    %128 = vector.broadcast %c0_i32_57 : i32 to vector<1x512xi32>
    %129 = arith.cmpi slt, %125, %128 : vector<1x512xi32>
    %c0_i32_58 = arith.constant 0 : i32
    %130 = arith.cmpi slt, %123, %c0_i32_58 : i32
    %131 = vector.broadcast %130 : i1 to vector<1x512xi1>
    %132 = vector.broadcast %131 : vector<1x512xi1> to vector<1x512xi1>
    %133 = arith.xori %129, %132 : vector<1x512xi1>
    %134 = arith.andi %133, %127 : vector<1x512xi1>
    %135 = vector.broadcast %123 : i32 to vector<1x512xi32>
    %136 = arith.addi %125, %135 : vector<1x512xi32>
    %137 = arith.select %134, %136, %125 : vector<1x512xi1>, vector<1x512xi32>
    %c51_i32 = arith.constant 51 : i32
    %138 = vector.broadcast %c51_i32 : i32 to vector<1x512xi32>
    %139 = arith.cmpi slt, %137, %138 : vector<1x512xi32>
    %cst_59 = arith.constant -1.000000e+30 : f32
    %140 = vector.shape_cast %139 : vector<1x512xi1> to vector<1x512xi1>
    %141 = vector.broadcast %140 : vector<1x512xi1> to vector<32x512xi1>
    %142 = vector.broadcast %cst_59 : f32 to vector<32x512xf32>
    %143 = arith.select %141, %120, %142 : vector<32x512xi1>, vector<32x512xf32>
    %cst_60 = arith.constant dense<0xFF800000> : vector<32xf32>
    %144 = vector.multi_reduction <maximumf>, %143, %cst_60 [1] : vector<32x512xf32> to vector<32xf32>
    %145 = vector.shape_cast %144 : vector<32xf32> to vector<32x1xf32>
    %146 = vector.broadcast %145 : vector<32x1xf32> to vector<32x512xf32>
    %147 = arith.subf %143, %146 : vector<32x512xf32>
    %148 = math.exp %147 : vector<32x512xf32>
    %c0_61 = arith.constant 0 : index
    %c0_62 = arith.constant 0 : index
    %149 = vector.load %arg18[%c0_61, %c0_62] : memref<512x4xf32, #tpu.memory_space<vmem>>, vector<512x4xf32>
    %cst_63 = arith.constant dense<0.000000e+00> : vector<32x4xf32>
    %150 = tpu.matmul %148, %149, %cst_63 {dimension_numbers = #tpu.dot_dimension_numbers<[1], [0], [0], [1], [0, 0, 1, 1], [], []>} : vector<32x512xf32>, vector<512x4xf32>, vector<32x4xf32> -> vector<32x4xf32>
    %c0_64 = arith.constant 0 : index
    %c0_65 = arith.constant 0 : index
    %151 = vector.load %arg19[%c0_64, %c0_65] : memref<512x4xf32, #tpu.memory_space<vmem>>, vector<512x4xf32>
    %cst_66 = arith.constant dense<0.000000e+00> : vector<32x4xf32>
    %152 = tpu.matmul %148, %151, %cst_66 {dimension_numbers = #tpu.dot_dimension_numbers<[1], [0], [0], [1], [0, 0, 1, 1], [], []>} : vector<32x512xf32>, vector<512x4xf32>, vector<32x4xf32> -> vector<32x4xf32>
    %153 = tpu.reciprocal %152 {approx = true} : vector<32x4xf32> -> vector<32x4xf32>
    %154 = arith.mulf %150, %153 : vector<32x4xf32>
    %c0_67 = arith.constant 0 : index
    %c0_68 = arith.constant 0 : index
    %155 = vector.load %arg20[%c0_67, %c0_68] : memref<32x4xf32, #tpu.memory_space<vmem>>, vector<32x4xf32>
    tpu.vector_store %arg20[%c0_67, %c0_68], %154 {strides = array<i32>} : memref<32x4xf32, #tpu.memory_space<vmem>>, vector<32x4xf32>,
    return
  }
  func.func @transform_0(%arg0: i32) -> (i32, i32) {
    %c0_i32 = arith.constant 0 : i32
    %c0_i32_0 = arith.constant 0 : i32
    return %arg0, %c0_i32 : i32, i32
  }
  func.func @transform_1(%arg0: i32) -> (i32, i32) {
    %c0_i32 = arith.constant 0 : i32
    %c0_i32_0 = arith.constant 0 : i32
    %c0_i32_1 = arith.constant 0 : i32
    return %c0_i32, %c0_i32_0 : i32, i32
  }
  func.func @transform_2(%arg0: i32) -> (i32, i32) {
    %c0_i32 = arith.constant 0 : i32
    %c0_i32_0 = arith.constant 0 : i32
    %c0_i32_1 = arith.constant 0 : i32
    return %c0_i32, %c0_i32_0 : i32, i32
  }
  func.func @transform_3(%arg0: i32) -> (i32, i32) {
    %c0_i32 = arith.constant 0 : i32
    %c0_i32_0 = arith.constant 0 : i32
    %c0_i32_1 = arith.constant 0 : i32
    return %c0_i32, %c0_i32_0 : i32, i32
  }
  func.func @transform_4(%arg0: i32) -> (i32, i32) {
    %c0_i32 = arith.constant 0 : i32
    %c0_i32_0 = arith.constant 0 : i32
    %c0_i32_1 = arith.constant 0 : i32
    return %c0_i32, %c0_i32_0 : i32, i32
  }
  func.func @transform_5(%arg0: i32) -> (i32, i32) {
    %c0_i32 = arith.constant 0 : i32
    %c0_i32_0 = arith.constant 0 : i32
    %c0_i32_1 = arith.constant 0 : i32
    return %c0_i32, %c0_i32_0 : i32, i32
  }
  func.func @transform_6(%arg0: i32) -> (i32, i32) {
    %c0_i32 = arith.constant 0 : i32
    %c0_i32_0 = arith.constant 0 : i32
    %c0_i32_1 = arith.constant 0 : i32
    return %c0_i32, %c0_i32_0 : i32, i32
  }
  func.func @transform_7(%arg0: i32) -> (i32, i32) {
    %c0_i32 = arith.constant 0 : i32
    %c0_i32_0 = arith.constant 0 : i32
    %c0_i32_1 = arith.constant 0 : i32
    return %c0_i32, %c0_i32_0 : i32, i32
  }
  func.func @transform_8(%arg0: i32) -> (i32, i32) {
    %c0_i32 = arith.constant 0 : i32
    %c0_i32_0 = arith.constant 0 : i32
    %c0_i32_1 = arith.constant 0 : i32
    return %c0_i32, %c0_i32_0 : i32, i32
  }
  func.func @transform_9(%arg0: i32) -> (i32, i32) {
    %c0_i32 = arith.constant 0 : i32
    %c0_i32_0 = arith.constant 0 : i32
    %c0_i32_1 = arith.constant 0 : i32
    return %c0_i32, %c0_i32_0 : i32, i32
  }
  func.func @transform_10(%arg0: i32) -> (i32, i32) {
    %c0_i32 = arith.constant 0 : i32
    %c0_i32_0 = arith.constant 0 : i32
    %c0_i32_1 = arith.constant 0 : i32
    return %c0_i32, %c0_i32_0 : i32, i32
  }
  func.func @transform_11(%arg0: i32) -> (i32, i32) {
    %c0_i32 = arith.constant 0 : i32
    %c0_i32_0 = arith.constant 0 : i32
    %c0_i32_1 = arith.constant 0 : i32
    return %c0_i32, %c0_i32_0 : i32, i32
  }
  func.func @transform_12(%arg0: i32) -> (i32, i32) {
    %c0_i32 = arith.constant 0 : i32
    %c0_i32_0 = arith.constant 0 : i32
    %c0_i32_1 = arith.constant 0 : i32
    return %c0_i32, %c0_i32_0 : i32, i32
  }
  func.func @transform_13(%arg0: i32) -> (i32, i32) {
    %c0_i32 = arith.constant 0 : i32
    %c0_i32_0 = arith.constant 0 : i32
    %c0_i32_1 = arith.constant 0 : i32
    return %c0_i32, %c0_i32_0 : i32, i32
  }
  func.func @transform_14(%arg0: i32) -> (i32, i32) {
    %c0_i32 = arith.constant 0 : i32
    %c0_i32_0 = arith.constant 0 : i32
    %c0_i32_1 = arith.constant 0 : i32
    return %c0_i32, %c0_i32_0 : i32, i32
  }
  func.func @transform_15(%arg0: i32) -> (i32, i32) {
    %c0_i32 = arith.constant 0 : i32
    %c0_i32_0 = arith.constant 0 : i32
    %c0_i32_1 = arith.constant 0 : i32
    return %c0_i32, %c0_i32_0 : i32, i32
  }
  func.func @transform_16(%arg0: i32) -> (i32, i32) {
    %c0_i32 = arith.constant 0 : i32
    %c0_i32_0 = arith.constant 0 : i32
    %c0_i32_1 = arith.constant 0 : i32
    return %c0_i32, %c0_i32_0 : i32, i32
  }
  func.func @transform_17(%arg0: i32) -> (i32, i32) {
    %c0_i32 = arith.constant 0 : i32
    %c0_i32_0 = arith.constant 0 : i32
    %c0_i32_1 = arith.constant 0 : i32
    return %c0_i32, %c0_i32_0 : i32, i32
  }
  func.func @transform_18(%arg0: i32) -> (i32, i32) {
    %c0_i32 = arith.constant 0 : i32
    %c0_i32_0 = arith.constant 0 : i32
    %c0_i32_1 = arith.constant 0 : i32
    return %c0_i32, %c0_i32_0 : i32, i32
  }
  func.func @transform_19(%arg0: i32) -> (i32, i32) {
    %c0_i32 = arith.constant 0 : i32
    %c0_i32_0 = arith.constant 0 : i32
    return %arg0, %c0_i32 : i32, i32
  }
}

</mosaic_0001>

<llo_original>
// kernel: evolvable_mlp_forward.1
$region0: #{evolvable_mlp_forward.1}
  #allocation0 [shape = 'u32[]', space=smem, size = 0x4, offset = 0x4, fixed_abs, tag = 'smem constant byte address 0x4 - core index']
  #allocation1 [shape = 'u32[144,128]{1,0:T(1,128)}', space=vmem, size = 0x12000, scoped, tag = 'internal scratch']
  %s0 = inlined_call_operand.vmem [shape: f32[64,16], index: 0, kind: input, shape index: {}]
  %s1 = inlined_call_operand.vmem [shape: bf16[16,64], index: 1, kind: input, shape index: {}]
  %s2 = inlined_call_operand.vmem [shape: f32[1,64], index: 2, kind: input, shape index: {}]
  %s3 = inlined_call_operand.vmem [shape: f32[1,64], index: 3, kind: input, shape index: {}]
  %s4 = inlined_call_operand.vmem [shape: f32[1,64], index: 4, kind: input, shape index: {}]
  %s5 = inlined_call_operand.vmem [shape: bf16[64,64], index: 5, kind: input, shape index: {}]
  %s6 = inlined_call_operand.vmem [shape: f32[1,64], index: 6, kind: input, shape index: {}]
  %s7 = inlined_call_operand.vmem [shape: f32[1,64], index: 7, kind: input, shape index: {}]
  %s8 = inlined_call_operand.vmem [shape: f32[1,64], index: 8, kind: input, shape index: {}]
  %s9 = inlined_call_operand.vmem [shape: bf16[64,128], index: 9, kind: input, shape index: {}]
  %s10 = inlined_call_operand.vmem [shape: f32[1,128], index: 10, kind: input, shape index: {}]
  %s11 = inlined_call_operand.vmem [shape: bf16[64,64], index: 11, kind: input, shape index: {}]
  %s12 = inlined_call_operand.vmem [shape: f32[1,64], index: 12, kind: input, shape index: {}]
  %s13 = inlined_call_operand.vmem [shape: f32[1,64], index: 13, kind: input, shape index: {}]
  %s14 = inlined_call_operand.vmem [shape: f32[1,64], index: 14, kind: input, shape index: {}]
  %s15 = inlined_call_operand.vmem [shape: bf16[64,512], index: 15, kind: input, shape index: {}]
  %s16 = inlined_call_operand.vmem [shape: f32[1,512], index: 16, kind: input, shape index: {}]
  %s17 = inlined_call_operand.vmem [shape: f32[512,4], index: 17, kind: input, shape index: {}]
  %s18 = inlined_call_operand.vmem [shape: f32[512,4], index: 18, kind: input, shape index: {}]
  %s19 = inlined_call_operand.vmem [shape: f32[64,4], index: 19, kind: output, shape index: {}]
  %s20 = sld [smem:[#allocation0]]
  $region109: #{evolvable_mlp_forward.1} parent=0
    _
  %s22 = ssub.s32 1, %s20
  %s23 = scalar_select 0, %s22, %s20
  loop: start=0, step=1, limit=4
  $region2: #{evolvable_mlp_forward.1} parent=0 // loop_pre_header
    _
  $region3: #{evolvable_mlp_forward.1} parent=0 // loop_header
    %s25 = sphi 0, %s29
    %p26 = scmp.ge.s32.totalorder %s25, 4
    %s35 = sphi 0, %s37
    %s38 = sphi 0, %s35
    %s39 = sphi 0, %s38
    %s55 = sphi 0, %s39
    %s59 = sphi 0, %s59
    %s61 = sphi 0, %s59
    %s62 = sphi 0, %s61
    %s76 = sphi 0, %s62
    %s80 = sphi 0, %s80
    %s82 = sphi 0, %s80
    %s83 = sphi 0, %s82
    %s97 = sphi 0, %s83
    %s101 = sphi 0, %s101
    %s103 = sphi 0, %s101
    %s104 = sphi 0, %s103
    %s118 = sphi 0, %s104
    %s122 = sphi 0, %s122
    %s124 = sphi 0, %s122
    %s125 = sphi 0, %s124
    %s139 = sphi 0, %s125
    %s143 = sphi 0, %s143
    %s145 = sphi 0, %s143
    %s146 = sphi 0, %s145
    %s160 = sphi 0, %s146
    %s164 = sphi 0, %s164
    %s166 = sphi 0, %s164
    %s167 = sphi 0, %s166
    %s181 = sphi 0, %s167
    %s185 = sphi 0, %s185
    %s187 = sphi 0, %s185
    %s188 = sphi 0, %s187
    %s202 = sphi 0, %s188
    %s206 = sphi 0, %s206
    %s208 = sphi 0, %s206
    %s209 = sphi 0, %s208
    %s223 = sphi 0, %s209
    %s227 = sphi 0, %s227
    %s229 = sphi 0, %s227
    %s230 = sphi 0, %s229
    %s244 = sphi 0, %s230
    %s248 = sphi 0, %s248
    %s250 = sphi 0, %s248
    %s251 = sphi 0, %s250
    %s265 = sphi 0, %s251
    %s269 = sphi 0, %s269
    %s271 = sphi 0, %s269
    %s272 = sphi 0, %s271
    %s286 = sphi 0, %s272
    %s290 = sphi 0, %s290
    %s292 = sphi 0, %s290
    %s293 = sphi 0, %s292
    %s307 = sphi 0, %s293
    %s311 = sphi 0, %s311
    %s313 = sphi 0, %s311
    %s314 = sphi 0, %s313
    %s328 = sphi 0, %s314
    %s332 = sphi 0, %s332
    %s334 = sphi 0, %s332
    %s335 = sphi 0, %s334
    %s349 = sphi 0, %s335
    %s353 = sphi 0, %s353
    %s355 = sphi 0, %s353
    %s356 = sphi 0, %s355
    %s370 = sphi 0, %s356
    %s374 = sphi 0, %s374
    %s376 = sphi 0, %s374
    %s377 = sphi 0, %s376
    %s391 = sphi 0, %s377
    %s395 = sphi 0, %s395
    %s397 = sphi 0, %s395
    %s398 = sphi 0, %s397
    %s412 = sphi 0, %s398
    %s416 = sphi 0, %s416
    %s418 = sphi 0, %s416
    %s419 = sphi 0, %s418
    %s433 = sphi 0, %s419
    %s439 = sphi 0, %s441
    %s442 = sphi 0, %s439
    %s443 = sphi 0, %s442
    %s459 = sphi 0, %s443
  $region4: #{evolvable_mlp_forward.1} parent=0 // loop_header_branch
    %28 = sbr.rel (%p26) target = $region8
  $region5: #{evolvable_mlp_forward.1} parent=0 // loop_body
    %s30 = ssub.s32 %s25, 1
    %s31 = ssub.s32 %s25, 2
    %s32 = sadd.s32 %s25, 1
    %s33 = ssub.s32 %s25, %s32
    %p34 = scmp.eq.s32.totalorder %s33, 0
    %s36 = sadd.s32 %s35, 1
    %s37 = scalar_select %p34, %s35, %s36
    %p40 = pneg %p34
    %p41 = scmp.eq.s32.totalorder %s25, 1
    %p42 = por %p40, %p41
    %p43 = scmp.ne.s32.totalorder %s35, %s38
    %p44 = scmp.eq.s32.totalorder %s25, 0
    %p45 = por %p43, %p44
    %p46 = scmp.ne.s32.totalorder %s35, %s38
    %p47 = scmp.eq.s32.totalorder %s30, 1
    %p48 = por %p46, %p47
    %p49 = scmp.ne.s32.totalorder %s38, %s39
    %p50 = scmp.eq.s32.totalorder %s30, 0
    %p51 = por %p49, %p50
    %p52 = scmp.ne.s32.totalorder %s38, %s39
    %p53 = scmp.eq.s32.totalorder %s31, 1
    %p54 = por %p52, %p53
    %p56 = scmp.ne.s32.totalorder %s39, %s55
    %p57 = scmp.eq.s32.totalorder %s31, 0
    %p58 = por %p56, %p57
    %s60 = sadd.s32 %s59, 1
    %p63 = scmp.eq.s32.totalorder %s25, 1
    %p64 = scmp.ne.s32.totalorder %s59, %s61
    %p65 = scmp.eq.s32.totalorder %s25, 0
    %p66 = por %p64, %p65
    %p67 = scmp.ne.s32.totalorder %s59, %s61
    %p68 = scmp.eq.s32.totalorder %s30, 1
    %p69 = por %p67, %p68
    %p70 = scmp.ne.s32.totalorder %s61, %s62
    %p71 = scmp.eq.s32.totalorder %s30, 0
    %p72 = por %p70, %p71
    %p73 = scmp.ne.s32.totalorder %s61, %s62
    %p74 = scmp.eq.s32.totalorder %s31, 1
    %p75 = por %p73, %p74
    %p77 = scmp.ne.s32.totalorder %s62, %s76
    %p78 = scmp.eq.s32.totalorder %s31, 0
    %p79 = por %p77, %p78
    %s81 = sadd.s32 %s80, 1
    %p84 = scmp.eq.s32.totalorder %s25, 1
    %p85 = scmp.ne.s32.totalorder %s80, %s82
    %p86 = scmp.eq.s32.totalorder %s25, 0
    %p87 = por %p85, %p86
    %p88 = scmp.ne.s32.totalorder %s80, %s82
    %p89 = scmp.eq.s32.totalorder %s30, 1
    %p90 = por %p88, %p89
    %p91 = scmp.ne.s32.totalorder %s82, %s83
    %p92 = scmp.eq.s32.totalorder %s30, 0
    %p93 = por %p91, %p92
    %p94 = scmp.ne.s32.totalorder %s82, %s83
    %p95 = scmp.eq.s32.totalorder %s31, 1
    %p96 = por %p94, %p95
    %p98 = scmp.ne.s32.totalorder %s83, %s97
    %p99 = scmp.eq.s32.totalorder %s31, 0
    %p100 = por %p98, %p99
    %s102 = sadd.s32 %s101, 1
    %p105 = scmp.eq.s32.totalorder %s25, 1
    %p106 = scmp.ne.s32.totalorder %s101, %s103
    %p107 = scmp.eq.s32.totalorder %s25, 0
    %p108 = por %p106, %p107
    %p109 = scmp.ne.s32.totalorder %s101, %s103
    %p110 = scmp.eq.s32.totalorder %s30, 1
    %p111 = por %p109, %p110
    %p112 = scmp.ne.s32.totalorder %s103, %s104
    %p113 = scmp.eq.s32.totalorder %s30, 0
    %p114 = por %p112, %p113
    %p115 = scmp.ne.s32.totalorder %s103, %s104
    %p116 = scmp.eq.s32.totalorder %s31, 1
    %p117 = por %p115, %p116
    %p119 = scmp.ne.s32.totalorder %s104, %s118
    %p120 = scmp.eq.s32.totalorder %s31, 0
    %p121 = por %p119, %p120
    %s123 = sadd.s32 %s122, 1
    %p126 = scmp.eq.s32.totalorder %s25, 1
    %p127 = scmp.ne.s32.totalorder %s122, %s124
    %p128 = scmp.eq.s32.totalorder %s25, 0
    %p129 = por %p127, %p128
    %p130 = scmp.ne.s32.totalorder %s122, %s124
    %p131 = scmp.eq.s32.totalorder %s30, 1
    %p132 = por %p130, %p131
    %p133 = scmp.ne.s32.totalorder %s124, %s125
    %p134 = scmp.eq.s32.totalorder %s30, 0
    %p135 = por %p133, %p134
    %p136 = scmp.ne.s32.totalorder %s124, %s125
    %p137 = scmp.eq.s32.totalorder %s31, 1
    %p138 = por %p136, %p137
    %p140 = scmp.ne.s32.totalorder %s125, %s139
    %p141 = scmp.eq.s32.totalorder %s31, 0
    %p142 = por %p140, %p141
    %s144 = sadd.s32 %s143, 1
    %p147 = scmp.eq.s32.totalorder %s25, 1
    %p148 = scmp.ne.s32.totalorder %s143, %s145
    %p149 = scmp.eq.s32.totalorder %s25, 0
    %p150 = por %p148, %p149
    %p151 = scmp.ne.s32.totalorder %s143, %s145
    %p152 = scmp.eq.s32.totalorder %s30, 1
    %p153 = por %p151, %p152
    %p154 = scmp.ne.s32.totalorder %s145, %s146
    %p155 = scmp.eq.s32.totalorder %s30, 0
    %p156 = por %p154, %p155
    %p157 = scmp.ne.s32.totalorder %s145, %s146
    %p158 = scmp.eq.s32.totalorder %s31, 1
    %p159 = por %p157, %p158
    %p161 = scmp.ne.s32.totalorder %s146, %s160
    %p162 = scmp.eq.s32.totalorder %s31, 0
    %p163 = por %p161, %p162
    %s165 = sadd.s32 %s164, 1
    %p168 = scmp.eq.s32.totalorder %s25, 1
    %p169 = scmp.ne.s32.totalorder %s164, %s166
    %p170 = scmp.eq.s32.totalorder %s25, 0
    %p171 = por %p169, %p170
    %p172 = scmp.ne.s32.totalorder %s164, %s166
    %p173 = scmp.eq.s32.totalorder %s30, 1
    %p174 = por %p172, %p173
    %p175 = scmp.ne.s32.totalorder %s166, %s167
    %p176 = scmp.eq.s32.totalorder %s30, 0
    %p177 = por %p175, %p176
    %p178 = scmp.ne.s32.totalorder %s166, %s167
    %p179 = scmp.eq.s32.totalorder %s31, 1
    %p180 = por %p178, %p179
    %p182 = scmp.ne.s32.totalorder %s167, %s181
    %p183 = scmp.eq.s32.totalorder %s31, 0
    %p184 = por %p182, %p183
    %s186 = sadd.s32 %s185, 1
    %p189 = scmp.eq.s32.totalorder %s25, 1
    %p190 = scmp.ne.s32.totalorder %s185, %s187
    %p191 = scmp.eq.s32.totalorder %s25, 0
    %p192 = por %p190, %p191
    %p193 = scmp.ne.s32.totalorder %s185, %s187
    %p194 = scmp.eq.s32.totalorder %s30, 1
    %p195 = por %p193, %p194
    %p196 = scmp.ne.s32.totalorder %s187, %s188
    %p197 = scmp.eq.s32.totalorder %s30, 0
    %p198 = por %p196, %p197
    %p199 = scmp.ne.s32.totalorder %s187, %s188
    %p200 = scmp.eq.s32.totalorder %s31, 1
    %p201 = por %p199, %p200
    %p203 = scmp.ne.s32.totalorder %s188, %s202
    %p204 = scmp.eq.s32.totalorder %s31, 0
    %p205 = por %p203, %p204
    %s207 = sadd.s32 %s206, 1
    %p210 = scmp.eq.s32.totalorder %s25, 1
    %p211 = scmp.ne.s32.totalorder %s206, %s208
    %p212 = scmp.eq.s32.totalorder %s25, 0
    %p213 = por %p211, %p212
    %p214 = scmp.ne.s32.totalorder %s206, %s208
    %p215 = scmp.eq.s32.totalorder %s30, 1
    %p216 = por %p214, %p215
    %p217 = scmp.ne.s32.totalorder %s208, %s209
    %p218 = scmp.eq.s32.totalorder %s30, 0
    %p219 = por %p217, %p218
    %p220 = scmp.ne.s32.totalorder %s208, %s209
    %p221 = scmp.eq.s32.totalorder %s31, 1
    %p222 = por %p220, %p221
    %p224 = scmp.ne.s32.totalorder %s209, %s223
    %p225 = scmp.eq.s32.totalorder %s31, 0
    %p226 = por %p224, %p225
    %s228 = sadd.s32 %s227, 1
    %p231 = scmp.eq.s32.totalorder %s25, 1
    %p232 = scmp.ne.s32.totalorder %s227, %s229
    %p233 = scmp.eq.s32.totalorder %s25, 0
    %p234 = por %p232, %p233
    %p235 = scmp.ne.s32.totalorder %s227, %s229
    %p236 = scmp.eq.s32.totalorder %s30, 1
    %p237 = por %p235, %p236
    %p238 = scmp.ne.s32.totalorder %s229, %s230
    %p239 = scmp.eq.s32.totalorder %s30, 0
    %p240 = por %p238, %p239
    %p241 = scmp.ne.s32.totalorder %s229, %s230
    %p242 = scmp.eq.s32.totalorder %s31, 1
    %p243 = por %p241, %p242
    %p245 = scmp.ne.s32.totalorder %s230, %s244
    %p246 = scmp.eq.s32.totalorder %s31, 0
    %p247 = por %p245, %p246
    %s249 = sadd.s32 %s248, 1
    %p252 = scmp.eq.s32.totalorder %s25, 1
    %p253 = scmp.ne.s32.totalorder %s248, %s250
    %p254 = scmp.eq.s32.totalorder %s25, 0
    %p255 = por %p253, %p254
    %p256 = scmp.ne.s32.totalorder %s248, %s250
    %p257 = scmp.eq.s32.totalorder %s30, 1
    %p258 = por %p256, %p257
    %p259 = scmp.ne.s32.totalorder %s250, %s251
    %p260 = scmp.eq.s32.totalorder %s30, 0
    %p261 = por %p259, %p260
    %p262 = scmp.ne.s32.totalorder %s250, %s251
    %p263 = scmp.eq.s32.totalorder %s31, 1
    %p264 = por %p262, %p263
    %p266 = scmp.ne.s32.totalorder %s251, %s265
    %p267 = scmp.eq.s32.totalorder %s31, 0
    %p268 = por %p266, %p267
    %s270 = sadd.s32 %s269, 1
    %p273 = scmp.eq.s32.totalorder %s25, 1
    %p274 = scmp.ne.s32.totalorder %s269, %s271
    %p275 = scmp.eq.s32.totalorder %s25, 0
    %p276 = por %p274, %p275
    %p277 = scmp.ne.s32.totalorder %s269, %s271
    %p278 = scmp.eq.s32.totalorder %s30, 1
    %p279 = por %p277, %p278
    %p280 = scmp.ne.s32.totalorder %s271, %s272
    %p281 = scmp.eq.s32.totalorder %s30, 0
    %p282 = por %p280, %p281
    %p283 = scmp.ne.s32.totalorder %s271, %s272
    %p284 = scmp.eq.s32.totalorder %s31, 1
    %p285 = por %p283, %p284
    %p287 = scmp.ne.s32.totalorder %s272, %s286
    %p288 = scmp.eq.s32.totalorder %s31, 0
    %p289 = por %p287, %p288
    %s291 = sadd.s32 %s290, 1
    %p294 = scmp.eq.s32.totalorder %s25, 1
    %p295 = scmp.ne.s32.totalorder %s290, %s292
    %p296 = scmp.eq.s32.totalorder %s25, 0
    %p297 = por %p295, %p296
    %p298 = scmp.ne.s32.totalorder %s290, %s292
    %p299 = scmp.eq.s32.totalorder %s30, 1
    %p300 = por %p298, %p299
    %p301 = scmp.ne.s32.totalorder %s292, %s293
    %p302 = scmp.eq.s32.totalorder %s30, 0
    %p303 = por %p301, %p302
    %p304 = scmp.ne.s32.totalorder %s292, %s293
    %p305 = scmp.eq.s32.totalorder %s31, 1
    %p306 = por %p304, %p305
    %p308 = scmp.ne.s32.totalorder %s293, %s307
    %p309 = scmp.eq.s32.totalorder %s31, 0
    %p310 = por %p308, %p309
    %s312 = sadd.s32 %s311, 1
    %p315 = scmp.eq.s32.totalorder %s25, 1
    %p316 = scmp.ne.s32.totalorder %s311, %s313
    %p317 = scmp.eq.s32.totalorder %s25, 0
    %p318 = por %p316, %p317
    %p319 = scmp.ne.s32.totalorder %s311, %s313
    %p320 = scmp.eq.s32.totalorder %s30, 1
    %p321 = por %p319, %p320
    %p322 = scmp.ne.s32.totalorder %s313, %s314
    %p323 = scmp.eq.s32.totalorder %s30, 0
    %p324 = por %p322, %p323
    %p325 = scmp.ne.s32.totalorder %s313, %s314
    %p326 = scmp.eq.s32.totalorder %s31, 1
    %p327 = por %p325, %p326
    %p329 = scmp.ne.s32.totalorder %s314, %s328
    %p330 = scmp.eq.s32.totalorder %s31, 0
    %p331 = por %p329, %p330
    %s333 = sadd.s32 %s332, 1
    %p336 = scmp.eq.s32.totalorder %s25, 1
    %p337 = scmp.ne.s32.totalorder %s332, %s334
    %p338 = scmp.eq.s32.totalorder %s25, 0
    %p339 = por %p337, %p338
    %p340 = scmp.ne.s32.totalorder %s332, %s334
    %p341 = scmp.eq.s32.totalorder %s30, 1
    %p342 = por %p340, %p341
    %p343 = scmp.ne.s32.totalorder %s334, %s335
    %p344 = scmp.eq.s32.totalorder %s30, 0
    %p345 = por %p343, %p344
    %p346 = scmp.ne.s32.totalorder %s334, %s335
    %p347 = scmp.eq.s32.totalorder %s31, 1
    %p348 = por %p346, %p347
    %p350 = scmp.ne.s32.totalorder %s335, %s349
    %p351 = scmp.eq.s32.totalorder %s31, 0
    %p352 = por %p350, %p351
    %s354 = sadd.s32 %s353, 1
    %p357 = scmp.eq.s32.totalorder %s25, 1
    %p358 = scmp.ne.s32.totalorder %s353, %s355
    %p359 = scmp.eq.s32.totalorder %s25, 0
    %p360 = por %p358, %p359
    %p361 = scmp.ne.s32.totalorder %s353, %s355
    %p362 = scmp.eq.s32.totalorder %s30, 1
    %p363 = por %p361, %p362
    %p364 = scmp.ne.s32.totalorder %s355, %s356
    %p365 = scmp.eq.s32.totalorder %s30, 0
    %p366 = por %p364, %p365
    %p367 = scmp.ne.s32.totalorder %s355, %s356
    %p368 = scmp.eq.s32.totalorder %s31, 1
    %p369 = por %p367, %p368
    %p371 = scmp.ne.s32.totalorder %s356, %s370
    %p372 = scmp.eq.s32.totalorder %s31, 0
    %p373 = por %p371, %p372
    %s375 = sadd.s32 %s374, 1
    %p378 = scmp.eq.s32.totalorder %s25, 1
    %p379 = scmp.ne.s32.totalorder %s374, %s376
    %p380 = scmp.eq.s32.totalorder %s25, 0
    %p381 = por %p379, %p380
    %p382 = scmp.ne.s32.totalorder %s374, %s376
    %p383 = scmp.eq.s32.totalorder %s30, 1
    %p384 = por %p382, %p383
    %p385 = scmp.ne.s32.totalorder %s376, %s377
    %p386 = scmp.eq.s32.totalorder %s30, 0
    %p387 = por %p385, %p386
    %p388 = scmp.ne.s32.totalorder %s376, %s377
    %p389 = scmp.eq.s32.totalorder %s31, 1
    %p390 = por %p388, %p389
    %p392 = scmp.ne.s32.totalorder %s377, %s391
    %p393 = scmp.eq.s32.totalorder %s31, 0
    %p394 = por %p392, %p393
    %s396 = sadd.s32 %s395, 1
    %p399 = scmp.eq.s32.totalorder %s25, 1
    %p400 = scmp.ne.s32.totalorder %s395, %s397
    %p401 = scmp.eq.s32.totalorder %s25, 0
    %p402 = por %p400, %p401
    %p403 = scmp.ne.s32.totalorder %s395, %s397
    %p404 = scmp.eq.s32.totalorder %s30, 1
    %p405 = por %p403, %p404
    %p406 = scmp.ne.s32.totalorder %s397, %s398
    %p407 = scmp.eq.s32.totalorder %s30, 0
    %p408 = por %p406, %p407
    %p409 = scmp.ne.s32.totalorder %s397, %s398
    %p410 = scmp.eq.s32.totalorder %s31, 1
    %p411 = por %p409, %p410
    %p413 = scmp.ne.s32.totalorder %s398, %s412
    %p414 = scmp.eq.s32.totalorder %s31, 0
    %p415 = por %p413, %p414
    %s417 = sadd.s32 %s416, 1
    %p420 = scmp.eq.s32.totalorder %s25, 1
    %p421 = scmp.ne.s32.totalorder %s416, %s418
    %p422 = scmp.eq.s32.totalorder %s25, 0
    %p423 = por %p421, %p422
    %p424 = scmp.ne.s32.totalorder %s416, %s418
    %p425 = scmp.eq.s32.totalorder %s30, 1
    %p426 = por %p424, %p425
    %p427 = scmp.ne.s32.totalorder %s418, %s419
    %p428 = scmp.eq.s32.totalorder %s30, 0
    %p429 = por %p427, %p428
    %p430 = scmp.ne.s32.totalorder %s418, %s419
    %p431 = scmp.eq.s32.totalorder %s31, 1
    %p432 = por %p430, %p431
    %p434 = scmp.ne.s32.totalorder %s419, %s433
    %p435 = scmp.eq.s32.totalorder %s31, 0
    %p436 = por %p434, %p435
    %s437 = ssub.s32 %s25, %s32
    %p438 = scmp.eq.s32.totalorder %s437, 0
    %s440 = sadd.s32 %s439, 1
    %s441 = scalar_select %p438, %s439, %s440
    %p444 = pneg %p438
    %p445 = scmp.eq.s32.totalorder %s25, 1
    %p446 = por %p444, %p445
    %p447 = scmp.ne.s32.totalorder %s439, %s442
    %p448 = scmp.eq.s32.totalorder %s25, 0
    %p449 = por %p447, %p448
    %p450 = scmp.ne.s32.totalorder %s439, %s442
    %p451 = scmp.eq.s32.totalorder %s30, 1
    %p452 = por %p450, %p451
    %p453 = scmp.ne.s32.totalorder %s442, %s443
    %p454 = scmp.eq.s32.totalorder %s30, 0
    %p455 = por %p453, %p454
    %p456 = scmp.ne.s32.totalorder %s442, %s443
    %p457 = scmp.eq.s32.totalorder %s31, 1
    %p458 = por %p456, %p457
    %p460 = scmp.ne.s32.totalorder %s443, %s459
    %p461 = scmp.eq.s32.totalorder %s31, 0
    %p462 = por %p460, %p461
    %p463 = scmp.le.s32.totalorder 1, %s25
    %p464 = scmp.lt.s32.totalorder %s25, 3
    %p465 = pnand %p463, %p464
    %p466 = pneg %p465
    // Predicated region
    $region9: #{evolvable_mlp_forward.1} parent=5 // pred_check
      _
    $region10: #{evolvable_mlp_forward.1} parent=5 // pred_check_branch
      %468 = sbr.rel (%p465) target = $region12
    $region11: #{evolvable_mlp_forward.1} parent=5 // pred_region
      %s469 = ssub.s32 %s25, 1
      // Predicated region
      $region13: #{evolvable_mlp_forward.1} parent=11 // pred_check
        %p470 = pneg %p72
      $region14: #{evolvable_mlp_forward.1} parent=11 // pred_check_branch
        %472 = sbr.rel (%p470) target = $region16
      $region15: #{evolvable_mlp_forward.1} parent=11 // pred_region
        _
      $region16: #{evolvable_mlp_forward.1} parent=11 // pred_fallthru
        _
      // Predicated region
      $region17: #{evolvable_mlp_forward.1} parent=11 // pred_check
        %p473 = pneg %p93
      $region18: #{evolvable_mlp_forward.1} parent=11 // pred_check_branch
        %475 = sbr.rel (%p473) target = $region20
      $region19: #{evolvable_mlp_forward.1} parent=11 // pred_region
        _
      $region20: #{evolvable_mlp_forward.1} parent=11 // pred_fallthru
        _
      // Predicated region
      $region21: #{evolvable_mlp_forward.1} parent=11 // pred_check
        %p476 = pneg %p114
      $region22: #{evolvable_mlp_forward.1} parent=11 // pred_check_branch
        %478 = sbr.rel (%p476) target = $region24
      $region23: #{evolvable_mlp_forward.1} parent=11 // pred_region
        _
      $region24: #{evolvable_mlp_forward.1} parent=11 // pred_fallthru
        _
      // Predicated region
      $region25: #{evolvable_mlp_forward.1} parent=11 // pred_check
        %p479 = pneg %p135
      $region26: #{evolvable_mlp_forward.1} parent=11 // pred_check_branch
        %481 = sbr.rel (%p479) target = $region28
      $region27: #{evolvable_mlp_forward.1} parent=11 // pred_region
        _
      $region28: #{evolvable_mlp_forward.1} parent=11 // pred_fallthru
        _
      // Predicated region
      $region29: #{evolvable_mlp_forward.1} parent=11 // pred_check
        %p482 = pneg %p156
      $region30: #{evolvable_mlp_forward.1} parent=11 // pred_check_branch
        %484 = sbr.rel (%p482) target = $region32
      $region31: #{evolvable_mlp_forward.1} parent=11 // pred_region
        _
      $region32: #{evolvable_mlp_forward.1} parent=11 // pred_fallthru
        _
      // Predicated region
      $region33: #{evolvable_mlp_forward.1} parent=11 // pred_check
        %p485 = pneg %p177
      $region34: #{evolvable_mlp_forward.1} parent=11 // pred_check_branch
        %487 = sbr.rel (%p485) target = $region36
      $region35: #{evolvable_mlp_forward.1} parent=11 // pred_region
        _
      $region36: #{evolvable_mlp_forward.1} parent=11 // pred_fallthru
        _
      // Predicated region
      $region37: #{evolvable_mlp_forward.1} parent=11 // pred_check
        %p488 = pneg %p198
      $region38: #{evolvable_mlp_forward.1} parent=11 // pred_check_branch
        %490 = sbr.rel (%p488) target = $region40
      $region39: #{evolvable_mlp_forward.1} parent=11 // pred_region
        _
      $region40: #{evolvable_mlp_forward.1} parent=11 // pred_fallthru
        _
      // Predicated region
      $region41: #{evolvable_mlp_forward.1} parent=11 // pred_check
        %p491 = pneg %p219
      $region42: #{evolvable_mlp_forward.1} parent=11 // pred_check_branch
        %493 = sbr.rel (%p491) target = $region44
      $region43: #{evolvable_mlp_forward.1} parent=11 // pred_region
        _
      $region44: #{evolvable_mlp_forward.1} parent=11 // pred_fallthru
        _
      // Predicated region
      $region45: #{evolvable_mlp_forward.1} parent=11 // pred_check
        %p494 = pneg %p240
      $region46: #{evolvable_mlp_forward.1} parent=11 // pred_check_branch
        %496 = sbr.rel (%p494) target = $region48
      $region47: #{evolvable_mlp_forward.1} parent=11 // pred_region
        _
      $region48: #{evolvable_mlp_forward.1} parent=11 // pred_fallthru
        _
      // Predicated region
      $region49: #{evolvable_mlp_forward.1} parent=11 // pred_check
        %p497 = pneg %p261
      $region50: #{evolvable_mlp_forward.1} parent=11 // pred_check_branch
        %499 = sbr.rel (%p497) target = $region52
      $region51: #{evolvable_mlp_forward.1} parent=11 // pred_region
        _
      $region52: #{evolvable_mlp_forward.1} parent=11 // pred_fallthru
        _
      // Predicated region
      $region53: #{evolvable_mlp_forward.1} parent=11 // pred_check
        %p500 = pneg %p282
      $region54: #{evolvable_mlp_forward.1} parent=11 // pred_check_branch
        %502 = sbr.rel (%p500) target = $region56
      $region55: #{evolvable_mlp_forward.1} parent=11 // pred_region
        _
      $region56: #{evolvable_mlp_forward.1} parent=11 // pred_fallthru
        _
      // Predicated region
      $region57: #{evolvable_mlp_forward.1} parent=11 // pred_check
        %p503 = pneg %p303
      $region58: #{evolvable_mlp_forward.1} parent=11 // pred_check_branch
        %505 = sbr.rel (%p503) target = $region60
      $region59: #{evolvable_mlp_forward.1} parent=11 // pred_region
        _
      $region60: #{evolvable_mlp_forward.1} parent=11 // pred_fallthru
        _
      // Predicated region
      $region61: #{evolvable_mlp_forward.1} parent=11 // pred_check
        %p506 = pneg %p324
      $region62: #{evolvable_mlp_forward.1} parent=11 // pred_check_branch
        %508 = sbr.rel (%p506) target = $region64
      $region63: #{evolvable_mlp_forward.1} parent=11 // pred_region
        _
      $region64: #{evolvable_mlp_forward.1} parent=11 // pred_fallthru
        _
      // Predicated region
      $region65: #{evolvable_mlp_forward.1} parent=11 // pred_check
        %p509 = pneg %p345
      $region66: #{evolvable_mlp_forward.1} parent=11 // pred_check_branch
        %511 = sbr.rel (%p509) target = $region68
      $region67: #{evolvable_mlp_forward.1} parent=11 // pred_region
        _
      $region68: #{evolvable_mlp_forward.1} parent=11 // pred_fallthru
        _
      // Predicated region
      $region69: #{evolvable_mlp_forward.1} parent=11 // pred_check
        %p512 = pneg %p366
      $region70: #{evolvable_mlp_forward.1} parent=11 // pred_check_branch
        %514 = sbr.rel (%p512) target = $region72
      $region71: #{evolvable_mlp_forward.1} parent=11 // pred_region
        _
      $region72: #{evolvable_mlp_forward.1} parent=11 // pred_fallthru
        _
      // Predicated region
      $region73: #{evolvable_mlp_forward.1} parent=11 // pred_check
        %p515 = pneg %p387
      $region74: #{evolvable_mlp_forward.1} parent=11 // pred_check_branch
        %517 = sbr.rel (%p515) target = $region76
      $region75: #{evolvable_mlp_forward.1} parent=11 // pred_region
        _
      $region76: #{evolvable_mlp_forward.1} parent=11 // pred_fallthru
        _
      // Predicated region
      $region77: #{evolvable_mlp_forward.1} parent=11 // pred_check
        %p518 = pneg %p408
      $region78: #{evolvable_mlp_forward.1} parent=11 // pred_check_branch
        %520 = sbr.rel (%p518) target = $region80
      $region79: #{evolvable_mlp_forward.1} parent=11 // pred_region
        _
      $region80: #{evolvable_mlp_forward.1} parent=11 // pred_fallthru
        _
      // Predicated region
      $region81: #{evolvable_mlp_forward.1} parent=11 // pred_check
        %p521 = pneg %p429
      $region82: #{evolvable_mlp_forward.1} parent=11 // pred_check_branch
        %523 = sbr.rel (%p521) target = $region84
      $region83: #{evolvable_mlp_forward.1} parent=11 // pred_region
        _
      $region84: #{evolvable_mlp_forward.1} parent=11 // pred_fallthru
        _
    $region12: #{evolvable_mlp_forward.1} parent=5 // pred_fallthru
      _
    %p524 = scmp.lt.s32.totalorder %s25, 2
    // Predicated region
    $region85: #{evolvable_mlp_forward.1} parent=5 // pred_check
      %p525 = pneg %p524
    $region86: #{evolvable_mlp_forward.1} parent=5 // pred_check_branch
      %527 = sbr.rel (%p525) target = $region88
    $region87: #{evolvable_mlp_forward.1} parent=5 // pred_region
      // Predicated region
      $region89: #{evolvable_mlp_forward.1} parent=87 // pred_check
        %p528 = pneg %p45
      $region90: #{evolvable_mlp_forward.1} parent=87 // pred_check_branch
        %530 = sbr.rel (%p528) target = $region92
      $region91: #{evolvable_mlp_forward.1} parent=87 // pred_region
        %s531 = smul.u32 4, %s25
        %p532 = scmp.lt.s32.totalorder %s531, 7
        %s533 = scalar_select %p532, %s531, 7
        %s534 = smul.addr %s533, 8
        %s535 = scalar_lea.vmem %s0, %s534
        %s536 = smul.u32 4, %s25
      $region92: #{evolvable_mlp_forward.1} parent=87 // pred_fallthru
        _
    $region88: #{evolvable_mlp_forward.1} parent=5 // pred_fallthru
      _
    %p537 = scmp.le.s32.totalorder 1, %s25
    %p538 = scmp.lt.s32.totalorder %s25, 3
    %p539 = pnand %p537, %p538
    %p540 = pneg %p539
    // Predicated region
    $region93: #{evolvable_mlp_forward.1} parent=5 // pred_check
      _
    $region94: #{evolvable_mlp_forward.1} parent=5 // pred_check_branch
      %542 = sbr.rel (%p539) target = $region96
    $region95: #{evolvable_mlp_forward.1} parent=5 // pred_region
      %s543 = ssub.s32 %s25, 1
      %s544 = smul.u32 4, %s30
      %p545 = scmp.lt.s32.totalorder %s544, 7
      %s546 = scalar_select %p545, %s544, 7
      %s547 = smul.addr %s546, 8
      %s548 = scalar_lea.vmem %s0, %s547
      %p549 = pneg %p51
      %p550 = pneg %p48
      %p551 = pneg %p72
      %p552 = pneg %p69
      %p553 = pneg %p93
      %p554 = pneg %p90
      %p555 = pneg %p114
      %p556 = pneg %p111
      %p557 = pneg %p135
      %p558 = pneg %p132
      %p559 = pneg %p156
      %p560 = pneg %p153
      %p561 = pneg %p177
      %p562 = pneg %p174
      %p563 = pneg %p198
      %p564 = pneg %p195
      %p565 = pneg %p219
      %p566 = pneg %p216
      %p567 = pneg %p240
      %p568 = pneg %p237
      %p569 = pneg %p261
      %p570 = pneg %p258
      %p571 = pneg %p282
      %p572 = pneg %p279
      %p573 = pneg %p303
      %p574 = pneg %p300
      %p575 = pneg %p324
      %p576 = pneg %p321
      %p577 = pneg %p345
      %p578 = pneg %p342
      %p579 = pneg %p366
      %p580 = pneg %p363
      %p581 = pneg %p387
      %p582 = pneg %p384
      %p583 = pneg %p408
      %p584 = pneg %p405
      %p585 = pneg %p429
      %p586 = pneg %p426
      %p587 = pneg %p455
      %p588 = pneg %p452
      %s589 = smul.u32 4, %s30
      %p590 = scmp.lt.s32.totalorder %s589, 7
      %s591 = scalar_select %p590, %s589, 7
      %s592 = smul.addr %s591, 8
      %s593 = scalar_lea.vmem %s19, %s592
      %s594 = smul.u32 4, %s30
      %p595 = scmp.lt.s32.totalorder %s594, 7
      %s596 = scalar_select %p595, %s594, 7
      %s597 = smul.addr %s596, 8
      %s598 = scalar_lea.vmem %s0, %s597
      %s599 = smul.u32 4, %s30
      %s600 = smul.u32 4, %s30
      %p601 = scmp.lt.s32.totalorder %s600, 7
      %s602 = scalar_select %p601, %s600, 7
      %s603 = smul.addr %s602, 8
      %s604 = scalar_lea.vmem %s19, %s603
      %s605 = smul.u32 4, %s30
      %v607 = vld [vmem:[%s598] sm:$0xff]
      %v608 = vld [vmem:[%s598 + $0x8] sm:$0xff]
      %v609 = vld [vmem:[%s598 + $0x10] sm:$0xff]
      %v610 = vld [vmem:[%s598 + $0x18] sm:$0xff]
      %v611 = vpack.c.bf16 %v608, %v607
      %v612 = vpack.c.bf16 %v610, %v609
      %v613 = vld [vmem:[%s1] sm:$0xf]
      %v614 = vld [vmem:[%s1 + $0x4] sm:$0xf]
      %v615 = vld [vmem:[%s2] sm:$0x1]
      %v617 = vlaneseq
      %v618 = vshrl.u32 %v617, 7
      %v619 = vsub.s32 0, %v618
      %v620 = vrot.slane %v615, %v619
      %v624 = vunpack.c.l.b16 %v613
      %v625 = vunpack.c.l.b16 %v614
      %v626 = vpack.c.b16 %v625, %v624
      %vm628 = vcmask 130048
      %v630 = vsel %vm628, %v611, 0
      %v633 = vsel %vm628, %v612, 0
      %635 = vmatprep.subr.bf16.mxu0 0
      %636 = vmatpush1.bf16.msra.mxu0 0
      %637 = vmatprep.subr.bf16.mxu0 0
      %638 = vmatpush1.bf16.msra.mxu0 0
      %639 = vmatprep.subr.bf16.mxu0 0
      %640 = vmatpush1.bf16.msra.mxu0 0
      %641 = vmatprep.subr.bf16.mxu0 0
      %642 = vmatpush1.bf16.msra.mxu0 0
      %643 = vmatprep.subr.bf16.mxu0 0
      %644 = vmatpush1.bf16.msra.mxu0 0
      %645 = vmatprep.subr.bf16.mxu0 0
      %646 = vmatpush1.bf16.msra.mxu0 0
      %647 = vmatprep.subr.bf16.mxu0 0
      %648 = vmatpush1.bf16.msra.mxu0 0
      %649 = vmatprep.subr.bf16.mxu0 0
      %650 = vmatpush1.bf16.msra.mxu0 %v626
      %651 = vmatprep.subr.bf16.mxu0 0
      %652 = vmatpush2.bf16.msra.mxu0 0
      %653 = vmatprep.subr.bf16.mxu0 0
      %654 = vmatpush2.bf16.msra.mxu0 0
      %655 = vmatprep.subr.bf16.mxu0 0
      %656 = vmatpush2.bf16.msra.mxu0 0
      %657 = vmatprep.subr.bf16.mxu0 0
      %658 = vmatpush2.bf16.msra.mxu0 0
      %659 = vmatprep.subr.bf16.mxu0 0
      %660 = vmatpush2.bf16.msra.mxu0 0
      %661 = vmatprep.subr.bf16.mxu0 0
      %662 = vmatpush2.bf16.msra.mxu0 0
      %663 = vmatprep.subr.bf16.mxu0 0
      %664 = vmatpush2.bf16.msra.mxu0 0
      %665 = vmatprep.subr.bf16.mxu0 0
      %666 = vmatpush2.bf16.msra.mxu0 0
      %667 = vmatprep.mubr.bf16.mxu0 0
      %668 = vmatmul.mubr.bf16.gmra.mxu0 %v630
      %v669 = vpop.f32.mrf.mxu0
      %v670 = vadd.f32 %v620, %v669
      %v671 = vpop.f32.mrf.mxu0
      %v672 = vpop.f32.mrf.mxu0
      %v673 = vadd.f32 %v620, %v672
      %v674 = vpop.f32.mrf.mxu0
      %675 = vmatprep.mubr.bf16.mxu0 0
      %676 = vmatmul.mubr.bf16.gmra.mxu0 %v633
      %v677 = vpop.f32.mrf.mxu0
      %v678 = vadd.f32 %v620, %v677
      %v679 = vpop.f32.mrf.mxu0
      %v680 = vpop.f32.mrf.mxu0
      %v681 = vadd.f32 %v620, %v680
      %v682 = vpop.f32.mrf.mxu0
      %683 = vdwg.mxu0
      %vm684 = vcmask 523264
      %v685 = vsel %vm684, %v670, 0.0
      %686 = vadd.xlane.f32.xlu0 %v685
      %v687 = vpop.xlane.xlu0 %686
      %v688 = vsel %vm684, %v673, 0.0
      %689 = vadd.xlane.f32.xlu0 %v688
      %v690 = vpop.xlane.xlu0 %689
      %v691 = vsel %vm684, %v678, 0.0
      %692 = vadd.xlane.f32.xlu0 %v691
      %v693 = vpop.xlane.xlu0 %692
      %v694 = vsel %vm684, %v681, 0.0
      %695 = vadd.xlane.f32.xlu0 %v694
      %v696 = vpop.xlane.xlu0 %695
      %v697 = vrcp.pop 64.0
      %v698 = vmul.f32 %v687, %v697
      %v699 = vmul.f32 %v690, %v697
      %v700 = vmul.f32 %v693, %v697
      %v701 = vmul.f32 %v696, %v697
      %v702 = vmul.f32 %v670, %v670
      %v703 = vmul.f32 %v673, %v673
      %v704 = vmul.f32 %v678, %v678
      %v705 = vmul.f32 %v681, %v681
      %v706 = vsel %vm684, %v702, 0.0
      %707 = vadd.xlane.f32.xlu0 %v706
      %v708 = vpop.xlane.xlu0 %707
      %v709 = vsel %vm684, %v703, 0.0
      %710 = vadd.xlane.f32.xlu0 %v709
      %v711 = vpop.xlane.xlu0 %710
      %v712 = vsel %vm684, %v704, 0.0
      %713 = vadd.xlane.f32.xlu0 %v712
      %v714 = vpop.xlane.xlu0 %713
      %v715 = vsel %vm684, %v705, 0.0
      %716 = vadd.xlane.f32.xlu0 %v715
      %v717 = vpop.xlane.xlu0 %716
      %v718 = vmul.f32 %v708, %v697
      %v719 = vmul.f32 %v711, %v697
      %v720 = vmul.f32 %v714, %v697
      %v721 = vmul.f32 %v717, %v697
      %v722 = vmul.f32 %v698, %v698
      %v723 = vmul.f32 %v699, %v699
      %v724 = vmul.f32 %v700, %v700
      %v725 = vmul.f32 %v701, %v701
      %v726 = vsub.f32 %v718, %v722
      %v727 = vsub.f32 %v719, %v723
      %v728 = vsub.f32 %v720, %v724
      %v729 = vsub.f32 %v721, %v725
      %v730 = vsub.f32 %v670, %v698
      %v731 = vsub.f32 %v673, %v699
      %v732 = vsub.f32 %v678, %v700
      %v733 = vsub.f32 %v681, %v701
      %v734 = vadd.f32 %v726, 1e-05
      %v735 = vadd.f32 %v727, 1e-05
      %v736 = vadd.f32 %v728, 1e-05
      %v737 = vadd.f32 %v729, 1e-05
      %v738 = vrsqrt.pop %v734
      %v739 = vrsqrt.pop %v735
      %v740 = vrsqrt.pop %v736
      %v741 = vrsqrt.pop %v737
      %v742 = vmul.f32 %v730, %v738
      %v743 = vmul.f32 %v731, %v739
      %v744 = vmul.f32 %v732, %v740
      %v745 = vmul.f32 %v733, %v741
      %v746 = vld [vmem:[%s3] sm:$0x1]
      %v748 = vlaneseq
      %v749 = vshrl.u32 %v748, 7
      %v750 = vsub.s32 0, %v749
      %v751 = vrot.slane %v746, %v750
      %v753 = vmul.f32 %v742, %v751
      %v754 = vmul.f32 %v743, %v751
      %v755 = vmul.f32 %v744, %v751
      %v756 = vmul.f32 %v745, %v751
      %v757 = vld [vmem:[%s4] sm:$0x1]
      %v759 = vlaneseq
      %v760 = vshrl.u32 %v759, 7
      %v761 = vsub.s32 0, %v760
      %v762 = vrot.slane %v757, %v761
      %v764 = vadd.f32 %v753, %v762
      %v765 = vadd.f32 %v754, %v762
      %v766 = vadd.f32 %v755, %v762
      %v767 = vadd.f32 %v756, %v762
      %v768 = vmax.f32 %v764, 0.0
      %v769 = vmax.f32 %v765, 0.0
      %v770 = vmax.f32 %v766, 0.0
      %v771 = vmax.f32 %v767, 0.0
      %v772 = vpack.c.bf16 %v769, %v768
      %v773 = vpack.c.bf16 %v771, %v770
      %v774 = vld [vmem:[%s5] sm:$0xf]
      %v775 = vld [vmem:[%s5 + $0x4] sm:$0xf]
      %v776 = vld [vmem:[%s5 + $0x8] sm:$0xf]
      %v777 = vld [vmem:[%s5 + $0xc] sm:$0xf]
      %v778 = vld [vmem:[%s5 + $0x10] sm:$0xf]
      %v779 = vld [vmem:[%s5 + $0x14] sm:$0xf]
      %v780 = vld [vmem:[%s5 + $0x18] sm:$0xf]
      %v781 = vld [vmem:[%s5 + $0x1c] sm:$0xf]
      %v782 = vld [vmem:[%s6] sm:$0x1]
      %v784 = vlaneseq
      %v785 = vshrl.u32 %v784, 7
      %v786 = vsub.s32 0, %v785
      %v787 = vrot.slane %v782, %v786
      %v797 = vunpack.c.l.b16 %v774
      %v798 = vunpack.c.l.b16 %v775
      %v799 = vunpack.c.l.b16 %v776
      %v800 = vunpack.c.l.b16 %v777
      %v801 = vunpack.c.l.b16 %v778
      %v802 = vunpack.c.l.b16 %v779
      %v803 = vunpack.c.l.b16 %v780
      %v804 = vunpack.c.l.b16 %v781
      %v805 = vpack.c.b16 %v798, %v797
      %v806 = vpack.c.b16 %v800, %v799
      %v807 = vpack.c.b16 %v802, %v801
      %v808 = vpack.c.b16 %v804, %v803
      %v814 = vsel %vm684, %v772, 0
      %v817 = vsel %vm684, %v773, 0
      %819 = vmatprep.subr.bf16.mxu0 0
      %820 = vmatpush1.bf16.msra.mxu0 0
      %821 = vmatprep.subr.bf16.mxu0 0
      %822 = vmatpush1.bf16.msra.mxu0 0
      %823 = vmatprep.subr.bf16.mxu0 0
      %824 = vmatpush1.bf16.msra.mxu0 0
      %825 = vmatprep.subr.bf16.mxu0 0
      %826 = vmatpush1.bf16.msra.mxu0 0
      %827 = vmatprep.subr.bf16.mxu0 0
      %828 = vmatpush1.bf16.msra.mxu0 %v808
      %829 = vmatprep.subr.bf16.mxu0 0
      %830 = vmatpush1.bf16.msra.mxu0 %v807
      %831 = vmatprep.subr.bf16.mxu0 0
      %832 = vmatpush1.bf16.msra.mxu0 %v806
      %833 = vmatprep.subr.bf16.mxu0 0
      %834 = vmatpush1.bf16.msra.mxu0 %v805
      %835 = vmatprep.subr.bf16.mxu0 0
      %836 = vmatpush2.bf16.msra.mxu0 0
      %837 = vmatprep.subr.bf16.mxu0 0
      %838 = vmatpush2.bf16.msra.mxu0 0
      %839 = vmatprep.subr.bf16.mxu0 0
      %840 = vmatpush2.bf16.msra.mxu0 0
      %841 = vmatprep.subr.bf16.mxu0 0
      %842 = vmatpush2.bf16.msra.mxu0 0
      %843 = vmatprep.subr.bf16.mxu0 0
      %844 = vmatpush2.bf16.msra.mxu0 0
      %845 = vmatprep.subr.bf16.mxu0 0
      %846 = vmatpush2.bf16.msra.mxu0 0
      %847 = vmatprep.subr.bf16.mxu0 0
      %848 = vmatpush2.bf16.msra.mxu0 0
      %849 = vmatprep.subr.bf16.mxu0 0
      %850 = vmatpush2.bf16.msra.mxu0 0
      %851 = vmatprep.mubr.bf16.mxu0 0
      %852 = vmatmul.mubr.bf16.gmra.mxu0 %v814
      %v853 = vpop.f32.mrf.mxu0
      %v854 = vadd.f32 %v787, %v853
      %v855 = vpop.f32.mrf.mxu0
      %v856 = vpop.f32.mrf.mxu0
      %v857 = vadd.f32 %v787, %v856
      %v858 = vpop.f32.mrf.mxu0
      %859 = vmatprep.mubr.bf16.mxu0 0
      %860 = vmatmul.mubr.bf16.gmra.mxu0 %v817
      %v861 = vpop.f32.mrf.mxu0
      %v862 = vadd.f32 %v787, %v861
      %v863 = vpop.f32.mrf.mxu0
      %v864 = vpop.f32.mrf.mxu0
      %v865 = vadd.f32 %v787, %v864
      %v866 = vpop.f32.mrf.mxu0
      %867 = vdwg.mxu0
      %v868 = vsel %vm684, %v854, 0.0
      %869 = vadd.xlane.f32.xlu0 %v868
      %v870 = vpop.xlane.xlu0 %869
      %v871 = vsel %vm684, %v857, 0.0
      %872 = vadd.xlane.f32.xlu0 %v871
      %v873 = vpop.xlane.xlu0 %872
      %v874 = vsel %vm684, %v862, 0.0
      %875 = vadd.xlane.f32.xlu0 %v874
      %v876 = vpop.xlane.xlu0 %875
      %v877 = vsel %vm684, %v865, 0.0
      %878 = vadd.xlane.f32.xlu0 %v877
      %v879 = vpop.xlane.xlu0 %878
      %v880 = vmul.f32 %v870, %v697
      %v881 = vmul.f32 %v873, %v697
      %v882 = vmul.f32 %v876, %v697
      %v883 = vmul.f32 %v879, %v697
      %v884 = vmul.f32 %v854, %v854
      %v885 = vmul.f32 %v857, %v857
      %v886 = vmul.f32 %v862, %v862
      %v887 = vmul.f32 %v865, %v865
      %v888 = vsel %vm684, %v884, 0.0
      %889 = vadd.xlane.f32.xlu0 %v888
      %v890 = vpop.xlane.xlu0 %889
      %v891 = vsel %vm684, %v885, 0.0
      %892 = vadd.xlane.f32.xlu0 %v891
      %v893 = vpop.xlane.xlu0 %892
      %v894 = vsel %vm684, %v886, 0.0
      %895 = vadd.xlane.f32.xlu0 %v894
      %v896 = vpop.xlane.xlu0 %895
      %v897 = vsel %vm684, %v887, 0.0
      %898 = vadd.xlane.f32.xlu0 %v897
      %v899 = vpop.xlane.xlu0 %898
      %v900 = vmul.f32 %v890, %v697
      %v901 = vmul.f32 %v893, %v697
      %v902 = vmul.f32 %v896, %v697
      %v903 = vmul.f32 %v899, %v697
      %v904 = vmul.f32 %v880, %v880
      %v905 = vmul.f32 %v881, %v881
      %v906 = vmul.f32 %v882, %v882
      %v907 = vmul.f32 %v883, %v883
      %v908 = vsub.f32 %v900, %v904
      %v909 = vsub.f32 %v901, %v905
      %v910 = vsub.f32 %v902, %v906
      %v911 = vsub.f32 %v903, %v907
      %v912 = vsub.f32 %v854, %v880
      %v913 = vsub.f32 %v857, %v881
      %v914 = vsub.f32 %v862, %v882
      %v915 = vsub.f32 %v865, %v883
      %v916 = vadd.f32 %v908, 1e-05
      %v917 = vadd.f32 %v909, 1e-05
      %v918 = vadd.f32 %v910, 1e-05
      %v919 = vadd.f32 %v911, 1e-05
      %v920 = vrsqrt.pop %v916
      %v921 = vrsqrt.pop %v917
      %v922 = vrsqrt.pop %v918
      %v923 = vrsqrt.pop %v919
      %v924 = vmul.f32 %v912, %v920
      %v925 = vmul.f32 %v913, %v921
      %v926 = vmul.f32 %v914, %v922
      %v927 = vmul.f32 %v915, %v923
      %v928 = vld [vmem:[%s7] sm:$0x1]
      %v930 = vlaneseq
      %v931 = vshrl.u32 %v930, 7
      %v932 = vsub.s32 0, %v931
      %v933 = vrot.slane %v928, %v932
      %v935 = vmul.f32 %v924, %v933
      %v936 = vmul.f32 %v925, %v933
      %v937 = vmul.f32 %v926, %v933
      %v938 = vmul.f32 %v927, %v933
      %v939 = vld [vmem:[%s8] sm:$0x1]
      %v941 = vlaneseq
      %v942 = vshrl.u32 %v941, 7
      %v943 = vsub.s32 0, %v942
      %v944 = vrot.slane %v939, %v943
      %v946 = vadd.f32 %v935, %v944
      %v947 = vadd.f32 %v936, %v944
      %v948 = vadd.f32 %v937, %v944
      %v949 = vadd.f32 %v938, %v944
      %v950 = vmax.f32 %v946, 0.0
      %v951 = vmax.f32 %v947, 0.0
      %v952 = vmax.f32 %v948, 0.0
      %v953 = vmax.f32 %v949, 0.0
      %v954 = vld [vmem:[%s11] sm:$0xf]
      %v955 = vld [vmem:[%s11 + $0x4] sm:$0xf]
      %v956 = vld [vmem:[%s11 + $0x8] sm:$0xf]
      %v957 = vld [vmem:[%s11 + $0xc] sm:$0xf]
      %v958 = vld [vmem:[%s11 + $0x10] sm:$0xf]
      %v959 = vld [vmem:[%s11 + $0x14] sm:$0xf]
      %v960 = vld [vmem:[%s11 + $0x18] sm:$0xf]
      %v961 = vld [vmem:[%s11 + $0x1c] sm:$0xf]
      %v962 = vld [vmem:[%s12] sm:$0x1]
      %v964 = vlaneseq
      %v965 = vshrl.u32 %v964, 7
      %v966 = vsub.s32 0, %v965
      %v967 = vrot.slane %v962, %v966
      %v977 = vunpack.c.l.b16 %v954
      %v978 = vunpack.c.l.b16 %v955
      %v979 = vunpack.c.l.b16 %v956
      %v980 = vunpack.c.l.b16 %v957
      %v981 = vunpack.c.l.b16 %v958
      %v982 = vunpack.c.l.b16 %v959
      %v983 = vunpack.c.l.b16 %v960
      %v984 = vunpack.c.l.b16 %v961
      %v985 = vpack.c.b16 %v978, %v977
      %v986 = vpack.c.b16 %v980, %v979
      %v987 = vpack.c.b16 %v982, %v981
      %v988 = vpack.c.b16 %v984, %v983
      %993 = vmatprep.subr.bf16.mxu0 0
      %994 = vmatpush1.bf16.msra.mxu0 0
      %995 = vmatprep.subr.bf16.mxu0 0
      %996 = vmatpush1.bf16.msra.mxu0 0
      %997 = vmatprep.subr.bf16.mxu0 0
      %998 = vmatpush1.bf16.msra.mxu0 0
      %999 = vmatprep.subr.bf16.mxu0 0
      %1000 = vmatpush1.bf16.msra.mxu0 0
      %1001 = vmatprep.subr.bf16.mxu0 0
      %1002 = vmatpush1.bf16.msra.mxu0 %v988
      %1003 = vmatprep.subr.bf16.mxu0 0
      %1004 = vmatpush1.bf16.msra.mxu0 %v987
      %1005 = vmatprep.subr.bf16.mxu0 0
      %1006 = vmatpush1.bf16.msra.mxu0 %v986
      %1007 = vmatprep.subr.bf16.mxu0 0
      %1008 = vmatpush1.bf16.msra.mxu0 %v985
      %1009 = vmatprep.subr.bf16.mxu0 0
      %1010 = vmatpush2.bf16.msra.mxu0 0
      %1011 = vmatprep.subr.bf16.mxu0 0
      %1012 = vmatpush2.bf16.msra.mxu0 0
      %1013 = vmatprep.subr.bf16.mxu0 0
      %1014 = vmatpush2.bf16.msra.mxu0 0
      %1015 = vmatprep.subr.bf16.mxu0 0
      %1016 = vmatpush2.bf16.msra.mxu0 0
      %1017 = vmatprep.subr.bf16.mxu0 0
      %1018 = vmatpush2.bf16.msra.mxu0 0
      %1019 = vmatprep.subr.bf16.mxu0 0
      %1020 = vmatpush2.bf16.msra.mxu0 0
      %1021 = vmatprep.subr.bf16.mxu0 0
      %1022 = vmatpush2.bf16.msra.mxu0 0
      %1023 = vmatprep.subr.bf16.mxu0 0
      %1024 = vmatpush2.bf16.msra.mxu0 0
      %1025 = vmatprep.mubr.bf16.mxu0 0
      %1026 = vmatmul.mubr.bf16.gmra.mxu0 %v814
      %v1027 = vpop.f32.mrf.mxu0
      %v1028 = vadd.f32 %v967, %v1027
      %v1029 = vpop.f32.mrf.mxu0
      %v1030 = vpop.f32.mrf.mxu0
      %v1031 = vadd.f32 %v967, %v1030
      %v1032 = vpop.f32.mrf.mxu0
      %1033 = vmatprep.mubr.bf16.mxu0 0
      %1034 = vmatmul.mubr.bf16.gmra.mxu0 %v817
      %v1035 = vpop.f32.mrf.mxu0
      %v1036 = vadd.f32 %v967, %v1035
      %v1037 = vpop.f32.mrf.mxu0
      %v1038 = vpop.f32.mrf.mxu0
      %v1039 = vadd.f32 %v967, %v1038
      %v1040 = vpop.f32.mrf.mxu0
      %1041 = vdwg.mxu0
      %v1042 = vsel %vm684, %v1028, 0.0
      %1043 = vadd.xlane.f32.xlu0 %v1042
      %v1044 = vpop.xlane.xlu0 %1043
      %v1045 = vsel %vm684, %v1031, 0.0
      %1046 = vadd.xlane.f32.xlu0 %v1045
      %v1047 = vpop.xlane.xlu0 %1046
      %v1048 = vsel %vm684, %v1036, 0.0
      %1049 = vadd.xlane.f32.xlu0 %v1048
      %v1050 = vpop.xlane.xlu0 %1049
      %v1051 = vsel %vm684, %v1039, 0.0
      %1052 = vadd.xlane.f32.xlu0 %v1051
      %v1053 = vpop.xlane.xlu0 %1052
      %v1054 = vmul.f32 %v1044, %v697
      %v1055 = vmul.f32 %v1047, %v697
      %v1056 = vmul.f32 %v1050, %v697
      %v1057 = vmul.f32 %v1053, %v697
      %v1058 = vmul.f32 %v1028, %v1028
      %v1059 = vmul.f32 %v1031, %v1031
      %v1060 = vmul.f32 %v1036, %v1036
      %v1061 = vmul.f32 %v1039, %v1039
      %v1062 = vsel %vm684, %v1058, 0.0
      %1063 = vadd.xlane.f32.xlu0 %v1062
      %v1064 = vpop.xlane.xlu0 %1063
      %v1065 = vsel %vm684, %v1059, 0.0
      %1066 = vadd.xlane.f32.xlu0 %v1065
      %v1067 = vpop.xlane.xlu0 %1066
      %v1068 = vsel %vm684, %v1060, 0.0
      %1069 = vadd.xlane.f32.xlu0 %v1068
      %v1070 = vpop.xlane.xlu0 %1069
      %v1071 = vsel %vm684, %v1061, 0.0
      %1072 = vadd.xlane.f32.xlu0 %v1071
      %v1073 = vpop.xlane.xlu0 %1072
      %v1074 = vmul.f32 %v1064, %v697
      %v1075 = vmul.f32 %v1067, %v697
      %v1076 = vmul.f32 %v1070, %v697
      %v1077 = vmul.f32 %v1073, %v697
      %v1078 = vmul.f32 %v1054, %v1054
      %v1079 = vmul.f32 %v1055, %v1055
      %v1080 = vmul.f32 %v1056, %v1056
      %v1081 = vmul.f32 %v1057, %v1057
      %v1082 = vsub.f32 %v1074, %v1078
      %v1083 = vsub.f32 %v1075, %v1079
      %v1084 = vsub.f32 %v1076, %v1080
      %v1085 = vsub.f32 %v1077, %v1081
      %v1086 = vsub.f32 %v1028, %v1054
      %v1087 = vsub.f32 %v1031, %v1055
      %v1088 = vsub.f32 %v1036, %v1056
      %v1089 = vsub.f32 %v1039, %v1057
      %v1090 = vadd.f32 %v1082, 1e-05
      %v1091 = vadd.f32 %v1083, 1e-05
      %v1092 = vadd.f32 %v1084, 1e-05
      %v1093 = vadd.f32 %v1085, 1e-05
      %v1094 = vrsqrt.pop %v1090
      %v1095 = vrsqrt.pop %v1091
      %v1096 = vrsqrt.pop %v1092
      %v1097 = vrsqrt.pop %v1093
      %v1098 = vmul.f32 %v1086, %v1094
      %v1099 = vmul.f32 %v1087, %v1095
      %v1100 = vmul.f32 %v1088, %v1096
      %v1101 = vmul.f32 %v1089, %v1097
      %v1102 = vld [vmem:[%s13] sm:$0x1]
      %v1104 = vlaneseq
      %v1105 = vshrl.u32 %v1104, 7
      %v1106 = vsub.s32 0, %v1105
      %v1107 = vrot.slane %v1102, %v1106
      %v1109 = vmul.f32 %v1098, %v1107
      %v1110 = vmul.f32 %v1099, %v1107
      %v1111 = vmul.f32 %v1100, %v1107
      %v1112 = vmul.f32 %v1101, %v1107
      %v1113 = vld [vmem:[%s14] sm:$0x1]
      %v1115 = vlaneseq
      %v1116 = vshrl.u32 %v1115, 7
      %v1117 = vsub.s32 0, %v1116
      %v1118 = vrot.slane %v1113, %v1117
      %v1120 = vadd.f32 %v1109, %v1118
      %v1121 = vadd.f32 %v1110, %v1118
      %v1122 = vadd.f32 %v1111, %v1118
      %v1123 = vadd.f32 %v1112, %v1118
      %v1124 = vmax.f32 %v1120, 0.0
      %v1125 = vmax.f32 %v1121, 0.0
      %v1126 = vmax.f32 %v1122, 0.0
      %v1127 = vmax.f32 %v1123, 0.0
      %v1128 = vpack.c.bf16 %v951, %v950
      %v1129 = vpack.c.bf16 %v953, %v952
      %v1130 = vld [vmem:[%s9] sm:$0xf]
      %v1131 = vld [vmem:[%s9 + $0x4] sm:$0xf]
      %v1132 = vld [vmem:[%s9 + $0x8] sm:$0xf]
      %v1133 = vld [vmem:[%s9 + $0xc] sm:$0xf]
      %v1134 = vld [vmem:[%s9 + $0x10] sm:$0xf]
      %v1135 = vld [vmem:[%s9 + $0x14] sm:$0xf]
      %v1136 = vld [vmem:[%s9 + $0x18] sm:$0xf]
      %v1137 = vld [vmem:[%s9 + $0x1c] sm:$0xf]
      %v1138 = vld [vmem:[%s10] sm:$0x1]
      %v1140 = vlaneseq
      %v1141 = vshrl.u32 %v1140, 7
      %v1142 = vsub.s32 0, %v1141
      %v1143 = vrot.slane %v1138, %v1142
      %v1153 = vunpack.c.l.b16 %v1130
      %v1154 = vunpack.c.l.b16 %v1131
      %v1155 = vunpack.c.l.b16 %v1132
      %v1156 = vunpack.c.l.b16 %v1133
      %v1157 = vunpack.c.l.b16 %v1134
      %v1158 = vunpack.c.l.b16 %v1135
      %v1159 = vunpack.c.l.b16 %v1136
      %v1160 = vunpack.c.l.b16 %v1137
      %v1161 = vpack.c.b16 %v1154, %v1153
      %v1162 = vpack.c.b16 %v1156, %v1155
      %v1163 = vpack.c.b16 %v1158, %v1157
      %v1164 = vpack.c.b16 %v1160, %v1159
      %v1170 = vsel %vm684, %v1128, 0
      %v1173 = vsel %vm684, %v1129, 0
      %1175 = vmatprep.subr.bf16.mxu0 0
      %1176 = vmatpush1.bf16.msra.mxu0 0
      %1177 = vmatprep.subr.bf16.mxu0 0
      %1178 = vmatpush1.bf16.msra.mxu0 0
      %1179 = vmatprep.subr.bf16.mxu0 0
      %1180 = vmatpush1.bf16.msra.mxu0 0
      %1181 = vmatprep.subr.bf16.mxu0 0
      %1182 = vmatpush1.bf16.msra.mxu0 0
      %1183 = vmatprep.subr.bf16.mxu0 0
      %1184 = vmatpush1.bf16.msra.mxu0 %v1164
      %1185 = vmatprep.subr.bf16.mxu0 0
      %1186 = vmatpush1.bf16.msra.mxu0 %v1163
      %1187 = vmatprep.subr.bf16.mxu0 0
      %1188 = vmatpush1.bf16.msra.mxu0 %v1162
      %1189 = vmatprep.subr.bf16.mxu0 0
      %1190 = vmatpush1.bf16.msra.mxu0 %v1161
      %1191 = vmatprep.subr.bf16.mxu0 0
      %1192 = vmatpush2.bf16.msra.mxu0 0
      %1193 = vmatprep.subr.bf16.mxu0 0
      %1194 = vmatpush2.bf16.msra.mxu0 0
      %1195 = vmatprep.subr.bf16.mxu0 0
      %1196 = vmatpush2.bf16.msra.mxu0 0
      %1197 = vmatprep.subr.bf16.mxu0 0
      %1198 = vmatpush2.bf16.msra.mxu0 0
      %1199 = vmatprep.subr.bf16.mxu0 0
      %1200 = vmatpush2.bf16.msra.mxu0 0
      %1201 = vmatprep.subr.bf16.mxu0 0
      %1202 = vmatpush2.bf16.msra.mxu0 0
      %1203 = vmatprep.subr.bf16.mxu0 0
      %1204 = vmatpush2.bf16.msra.mxu0 0
      %1205 = vmatprep.subr.bf16.mxu0 0
      %1206 = vmatpush2.bf16.msra.mxu0 0
      %1207 = vmatprep.mubr.bf16.mxu0 0
      %1208 = vmatmul.mubr.bf16.gmra.mxu0 %v1170
      %v1209 = vpop.f32.mrf.mxu0
      %v1210 = vadd.f32 %v1143, %v1209
      %v1211 = vpop.f32.mrf.mxu0
      %v1212 = vpop.f32.mrf.mxu0
      %v1213 = vadd.f32 %v1143, %v1212
      %v1214 = vpop.f32.mrf.mxu0
      %1215 = vmatprep.mubr.bf16.mxu0 0
      %1216 = vmatmul.mubr.bf16.gmra.mxu0 %v1173
      %v1217 = vpop.f32.mrf.mxu0
      %v1218 = vadd.f32 %v1143, %v1217
      %v1219 = vpop.f32.mrf.mxu0
      %v1220 = vpop.f32.mrf.mxu0
      %v1221 = vadd.f32 %v1143, %v1220
      %v1222 = vpop.f32.mrf.mxu0
      %1223 = vdwg.mxu0
      %v1224 = vpack.c.bf16 %v1125, %v1124
      %v1225 = vpack.c.bf16 %v1127, %v1126
      %v1226 = vld [vmem:[%s15] sm:$0xff]
      %v1227 = vld [vmem:[%s15 + $0x8] sm:$0xff]
      %v1228 = vld [vmem:[%s15 + $0x10] sm:$0xff]
      %v1229 = vld [vmem:[%s15 + $0x18] sm:$0xff]
      %v1230 = vld [vmem:[%s15 + $0x20] sm:$0xff]
      %v1231 = vld [vmem:[%s15 + $0x28] sm:$0xff]
      %v1232 = vld [vmem:[%s15 + $0x30] sm:$0xff]
      %v1233 = vld [vmem:[%s15 + $0x38] sm:$0xff]
      %v1234 = vld [vmem:[%s15 + $0x40] sm:$0xff]
      %v1235 = vld [vmem:[%s15 + $0x48] sm:$0xff]
      %v1236 = vld [vmem:[%s15 + $0x50] sm:$0xff]
      %v1237 = vld [vmem:[%s15 + $0x58] sm:$0xff]
      %v1238 = vld [vmem:[%s15 + $0x60] sm:$0xff]
      %v1239 = vld [vmem:[%s15 + $0x68] sm:$0xff]
      %v1240 = vld [vmem:[%s15 + $0x70] sm:$0xff]
      %v1241 = vld [vmem:[%s15 + $0x78] sm:$0xff]
      %v1242 = vld [vmem:[%s16] sm:$0xf]
      %v1244 = vlaneseq
      %v1245 = vshrl.u32 %v1244, 7
      %v1246 = vsub.s32 0, %v1245
      %v1247 = vrot.slane %v1242, %v1246
      %v1248 = vlaneseq
      %v1249 = vshrl.u32 %v1248, 7
      %v1250 = vsub.s32 1, %v1249
      %v1251 = vrot.slane %v1242, %v1250
      %v1252 = vlaneseq
      %v1253 = vshrl.u32 %v1252, 7
      %v1254 = vsub.s32 2, %v1253
      %v1255 = vrot.slane %v1242, %v1254
      %v1256 = vlaneseq
      %v1257 = vshrl.u32 %v1256, 7
      %v1258 = vsub.s32 3, %v1257
      %v1259 = vrot.slane %v1242, %v1258
      %v1280 = vunpack.c.l.b16 %v1226
      %v1281 = vunpack.c.h.b16 %v1226
      %v1282 = vunpack.c.l.b16 %v1227
      %v1283 = vunpack.c.h.b16 %v1227
      %v1284 = vunpack.c.l.b16 %v1228
      %v1285 = vunpack.c.h.b16 %v1228
      %v1286 = vunpack.c.l.b16 %v1229
      %v1287 = vunpack.c.h.b16 %v1229
      %v1288 = vunpack.c.l.b16 %v1230
      %v1289 = vunpack.c.h.b16 %v1230
      %v1290 = vunpack.c.l.b16 %v1231
      %v1291 = vunpack.c.h.b16 %v1231
      %v1292 = vunpack.c.l.b16 %v1232
      %v1293 = vunpack.c.h.b16 %v1232
      %v1294 = vunpack.c.l.b16 %v1233
      %v1295 = vunpack.c.h.b16 %v1233
      %v1296 = vunpack.c.l.b16 %v1234
      %v1297 = vunpack.c.h.b16 %v1234
      %v1298 = vunpack.c.l.b16 %v1235
      %v1299 = vunpack.c.h.b16 %v1235
      %v1300 = vunpack.c.l.b16 %v1236
      %v1301 = vunpack.c.h.b16 %v1236
      %v1302 = vunpack.c.l.b16 %v1237
      %v1303 = vunpack.c.h.b16 %v1237
      %v1304 = vunpack.c.l.b16 %v1238
      %v1305 = vunpack.c.h.b16 %v1238
      %v1306 = vunpack.c.l.b16 %v1239
      %v1307 = vunpack.c.h.b16 %v1239
      %v1308 = vunpack.c.l.b16 %v1240
      %v1309 = vunpack.c.h.b16 %v1240
      %v1310 = vunpack.c.l.b16 %v1241
      %v1311 = vunpack.c.h.b16 %v1241
      %v1312 = vpack.c.b16 %v1284, %v1280
      %v1313 = vpack.c.b16 %v1285, %v1281
      %v1314 = vpack.c.b16 %v1286, %v1282
      %v1315 = vpack.c.b16 %v1287, %v1283
      %v1316 = vpack.c.b16 %v1292, %v1288
      %v1317 = vpack.c.b16 %v1293, %v1289
      %v1318 = vpack.c.b16 %v1294, %v1290
      %v1319 = vpack.c.b16 %v1295, %v1291
      %v1320 = vpack.c.b16 %v1300, %v1296
      %v1321 = vpack.c.b16 %v1301, %v1297
      %v1322 = vpack.c.b16 %v1302, %v1298
      %v1323 = vpack.c.b16 %v1303, %v1299
      %v1324 = vpack.c.b16 %v1308, %v1304
      %v1325 = vpack.c.b16 %v1309, %v1305
      %v1326 = vpack.c.b16 %v1310, %v1306
      %v1327 = vpack.c.b16 %v1311, %v1307
      %v1345 = vsel %vm684, %v1224, 0
      %v1348 = vsel %vm684, %v1225, 0
      %1350 = vmatprep.subr.bf16.mxu0 0
      %1351 = vmatpush1.bf16.msra.mxu0 0
      %1352 = vmatprep.subr.bf16.mxu0 0
      %1353 = vmatpush1.bf16.msra.mxu0 0
      %1354 = vmatprep.subr.bf16.mxu0 0
      %1355 = vmatpush1.bf16.msra.mxu0 0
      %1356 = vmatprep.subr.bf16.mxu0 0
      %1357 = vmatpush1.bf16.msra.mxu0 0
      %1358 = vmatprep.subr.bf16.mxu0 %v1325
      %1359 = vmatpush1.bf16.msra.mxu0 %v1324
      %1360 = vmatprep.subr.bf16.mxu0 %v1321
      %1361 = vmatpush1.bf16.msra.mxu0 %v1320
      %1362 = vmatprep.subr.bf16.mxu0 %v1317
      %1363 = vmatpush1.bf16.msra.mxu0 %v1316
      %1364 = vmatprep.subr.bf16.mxu0 %v1313
      %1365 = vmatpush1.bf16.msra.mxu0 %v1312
      %1366 = vmatprep.subr.bf16.mxu0 0
      %1367 = vmatpush2.bf16.msra.mxu0 0
      %1368 = vmatprep.subr.bf16.mxu0 0
      %1369 = vmatpush2.bf16.msra.mxu0 0
      %1370 = vmatprep.subr.bf16.mxu0 0
      %1371 = vmatpush2.bf16.msra.mxu0 0
      %1372 = vmatprep.subr.bf16.mxu0 0
      %1373 = vmatpush2.bf16.msra.mxu0 0
      %1374 = vmatprep.subr.bf16.mxu0 0
      %1375 = vmatpush2.bf16.msra.mxu0 0
      %1376 = vmatprep.subr.bf16.mxu0 0
      %1377 = vmatpush2.bf16.msra.mxu0 0
      %1378 = vmatprep.subr.bf16.mxu0 0
      %1379 = vmatpush2.bf16.msra.mxu0 0
      %1380 = vmatprep.subr.bf16.mxu0 0
      %1381 = vmatpush2.bf16.msra.mxu0 0
      %1382 = vmatprep.mubr.bf16.mxu0 0
      %1383 = vmatmul.mubr.bf16.gmra.mxu0 %v1345
      %v1384 = vpop.f32.mrf.mxu0
      %v1385 = vadd.f32 %v1247, %v1384
      %v1386 = vpop.f32.mrf.mxu0
      %v1387 = vadd.f32 %v1251, %v1386
      %v1388 = vpop.f32.mrf.mxu0
      %v1389 = vadd.f32 %v1247, %v1388
      %v1390 = vpop.f32.mrf.mxu0
      %v1391 = vadd.f32 %v1251, %v1390
      %1392 = vmatprep.mubr.bf16.mxu0 0
      %1393 = vmatmul.mubr.bf16.gmra.mxu0 %v1348
      %v1394 = vpop.f32.mrf.mxu0
      %v1395 = vadd.f32 %v1247, %v1394
      %v1396 = vpop.f32.mrf.mxu0
      %v1397 = vadd.f32 %v1251, %v1396
      %v1398 = vpop.f32.mrf.mxu0
      %v1399 = vadd.f32 %v1247, %v1398
      %v1400 = vpop.f32.mrf.mxu0
      %v1401 = vadd.f32 %v1251, %v1400
      %1402 = vdwg.mxu0
      %1403 = vmatprep.subr.bf16.mxu0 0
      %1404 = vmatpush1.bf16.msra.mxu0 0
      %1405 = vmatprep.subr.bf16.mxu0 0
      %1406 = vmatpush1.bf16.msra.mxu0 0
      %1407 = vmatprep.subr.bf16.mxu0 0
      %1408 = vmatpush1.bf16.msra.mxu0 0
      %1409 = vmatprep.subr.bf16.mxu0 0
      %1410 = vmatpush1.bf16.msra.mxu0 0
      %1411 = vmatprep.subr.bf16.mxu0 %v1327
      %1412 = vmatpush1.bf16.msra.mxu0 %v1326
      %1413 = vmatprep.subr.bf16.mxu0 %v1323
      %1414 = vmatpush1.bf16.msra.mxu0 %v1322
      %1415 = vmatprep.subr.bf16.mxu0 %v1319
      %1416 = vmatpush1.bf16.msra.mxu0 %v1318
      %1417 = vmatprep.subr.bf16.mxu0 %v1315
      %1418 = vmatpush1.bf16.msra.mxu0 %v1314
      %1419 = vmatprep.subr.bf16.mxu0 0
      %1420 = vmatpush2.bf16.msra.mxu0 0
      %1421 = vmatprep.subr.bf16.mxu0 0
      %1422 = vmatpush2.bf16.msra.mxu0 0
      %1423 = vmatprep.subr.bf16.mxu0 0
      %1424 = vmatpush2.bf16.msra.mxu0 0
      %1425 = vmatprep.subr.bf16.mxu0 0
      %1426 = vmatpush2.bf16.msra.mxu0 0
      %1427 = vmatprep.subr.bf16.mxu0 0
      %1428 = vmatpush2.bf16.msra.mxu0 0
      %1429 = vmatprep.subr.bf16.mxu0 0
      %1430 = vmatpush2.bf16.msra.mxu0 0
      %1431 = vmatprep.subr.bf16.mxu0 0
      %1432 = vmatpush2.bf16.msra.mxu0 0
      %1433 = vmatprep.subr.bf16.mxu0 0
      %1434 = vmatpush2.bf16.msra.mxu0 0
      %1435 = vmatprep.mubr.bf16.mxu0 0
      %1436 = vmatmul.mubr.bf16.gmra.mxu0 %v1345
      %v1437 = vpop.f32.mrf.mxu0
      %v1438 = vadd.f32 %v1255, %v1437
      %v1439 = vpop.f32.mrf.mxu0
      %v1440 = vadd.f32 %v1259, %v1439
      %v1441 = vpop.f32.mrf.mxu0
      %v1442 = vadd.f32 %v1255, %v1441
      %v1443 = vpop.f32.mrf.mxu0
      %v1444 = vadd.f32 %v1259, %v1443
      %1445 = vmatprep.mubr.bf16.mxu0 0
      %1446 = vmatmul.mubr.bf16.gmra.mxu0 %v1348
      %v1447 = vpop.f32.mrf.mxu0
      %v1448 = vadd.f32 %v1255, %v1447
      %v1449 = vpop.f32.mrf.mxu0
      %v1450 = vadd.f32 %v1259, %v1449
      %v1451 = vpop.f32.mrf.mxu0
      %v1452 = vadd.f32 %v1255, %v1451
      %v1453 = vpop.f32.mrf.mxu0
      %v1454 = vadd.f32 %v1259, %v1453
      %1455 = vdwg.mxu0
      %v1456 = vadd.f32 %v1385, %v1387
      %v1457 = vadd.f32 %v1389, %v1391
      %v1458 = vadd.f32 %v1395, %v1397
      %v1459 = vadd.f32 %v1399, %v1401
      %v1460 = vadd.f32 %v1456, %v1438
      %v1461 = vadd.f32 %v1457, %v1442
      %v1462 = vadd.f32 %v1458, %v1448
      %v1463 = vadd.f32 %v1459, %v1452
      %v1464 = vadd.f32 %v1460, %v1440
      %v1465 = vadd.f32 %v1461, %v1444
      %v1466 = vadd.f32 %v1462, %v1450
      %v1467 = vadd.f32 %v1463, %v1454
      %v1468 = vmul.f32 %v1464, 0.25
      %v1469 = vmul.f32 %v1465, 0.25
      %v1470 = vmul.f32 %v1466, 0.25
      %v1471 = vmul.f32 %v1467, 0.25
      %v1472 = vsub.f32 %v1210, %v1468
      %v1473 = vsub.f32 %v1213, %v1469
      %v1474 = vsub.f32 %v1218, %v1470
      %v1475 = vsub.f32 %v1221, %v1471
      %v1476 = vadd.f32 %v1385, %v1472
      %v1477 = vadd.f32 %v1387, %v1472
      %v1478 = vadd.f32 %v1438, %v1472
      %v1479 = vadd.f32 %v1440, %v1472
      %v1480 = vadd.f32 %v1389, %v1473
      %v1481 = vadd.f32 %v1391, %v1473
      %v1482 = vadd.f32 %v1442, %v1473
      %v1483 = vadd.f32 %v1444, %v1473
      %v1484 = vadd.f32 %v1395, %v1474
      %v1485 = vadd.f32 %v1397, %v1474
      %v1486 = vadd.f32 %v1448, %v1474
      %v1487 = vadd.f32 %v1450, %v1474
      %v1488 = vadd.f32 %v1399, %v1475
      %v1489 = vadd.f32 %v1401, %v1475
      %v1490 = vadd.f32 %v1452, %v1475
      %v1491 = vadd.f32 %v1454, %v1475
      %v1492 = vlaneseq
      %v1493 = vand.u32 %v1492, 127
      %v1494 = vadd.s32 %v1493, 128
      %v1495 = vadd.s32 %v1493, 256
      %v1496 = vadd.s32 %v1493, 384
      %vm1497 = vcmp.lt.s32.totalorder %v1493, 0
      %v1498 = vsub.s32 0, %v1493
      %v1499 = vsel %vm1497, %v1498, %v1493
      %v1500 = vshrl.u32 %v1499, 7
      %v1501 = vand.u32 %v1499, 127
      %v1502 = vsub.s32 0, %v1501
      %v1503 = vsel %vm1497, %v1502, %v1501
      %vm1504 = vcmp.lt.s32.totalorder %v1494, 0
      %v1505 = vsub.s32 0, %v1494
      %v1506 = vsel %vm1504, %v1505, %v1494
      %v1507 = vshrl.u32 %v1506, 7
      %v1508 = vand.u32 %v1506, 127
      %v1509 = vsub.s32 0, %v1508
      %v1510 = vsel %vm1504, %v1509, %v1508
      %vm1511 = vcmp.lt.s32.totalorder %v1495, 0
      %v1512 = vsub.s32 0, %v1495
      %v1513 = vsel %vm1511, %v1512, %v1495
      %v1514 = vshrl.u32 %v1513, 7
      %v1515 = vand.u32 %v1513, 127
      %v1516 = vsub.s32 0, %v1515
      %v1517 = vsel %vm1511, %v1516, %v1515
      %vm1518 = vcmp.lt.s32.totalorder %v1496, 0
      %v1519 = vsub.s32 0, %v1496
      %v1520 = vsel %vm1518, %v1519, %v1496
      %v1521 = vshrl.u32 %v1520, 7
      %v1522 = vand.u32 %v1520, 127
      %v1523 = vsub.s32 0, %v1522
      %v1524 = vsel %vm1518, %v1523, %v1522
      %vm1525 = vcmp.ne.s32.totalorder %v1503, 0
      %vm1526 = vcmp.ne.s32.totalorder %v1510, 0
      %vm1527 = vcmp.ne.s32.totalorder %v1517, 0
      %vm1528 = vcmp.ne.s32.totalorder %v1524, 0
      %vm1529 = vcmp.lt.s32.totalorder %v1503, 0
      %vm1530 = vcmp.lt.s32.totalorder %v1510, 0
      %vm1531 = vcmp.lt.s32.totalorder %v1517, 0
      %vm1532 = vcmp.lt.s32.totalorder %v1524, 0
      %vm1533 = vmand %vm1529, %vm1525
      %vm1534 = vmand %vm1530, %vm1526
      %vm1535 = vmand %vm1531, %vm1527
      %vm1536 = vmand %vm1532, %vm1528
      %v1537 = vadd.s32 %v1503, 128
      %v1538 = vadd.s32 %v1510, 128
      %v1539 = vadd.s32 %v1517, 128
      %v1540 = vadd.s32 %v1524, 128
      %v1541 = vsel %vm1533, %v1537, %v1503
      %v1542 = vsel %vm1534, %v1538, %v1510
      %v1543 = vsel %vm1535, %v1539, %v1517
      %v1544 = vsel %vm1536, %v1540, %v1524
      %vm1545 = vcmp.lt.s32.totalorder %v1541, 51
      %vm1546 = vcmp.lt.s32.totalorder %v1542, 51
      %vm1547 = vcmp.lt.s32.totalorder %v1543, 51
      %vm1548 = vcmp.lt.s32.totalorder %v1544, 51
      %v1549 = vsel %vm1545, 1, 0
      %v1550 = vsel %vm1546, 1, 0
      %v1551 = vsel %vm1547, 1, 0
      %v1552 = vsel %vm1548, 1, 0
      %vm1553 = vcmp.eq.s32.totalorder %v1549, 1
      %vm1554 = vcmp.eq.s32.totalorder %v1550, 1
      %vm1555 = vcmp.eq.s32.totalorder %v1551, 1
      %vm1556 = vcmp.eq.s32.totalorder %v1552, 1
      %v1557 = vsel %vm1553, %v1476, -1e+30
      %v1558 = vsel %vm1554, %v1477, -1e+30
      %v1559 = vsel %vm1555, %v1478, -1e+30
      %v1560 = vsel %vm1556, %v1479, -1e+30
      %v1561 = vsel %vm1553, %v1480, -1e+30
      %v1562 = vsel %vm1554, %v1481, -1e+30
      %v1563 = vsel %vm1555, %v1482, -1e+30
      %v1564 = vsel %vm1556, %v1483, -1e+30
      %v1565 = vsel %vm1553, %v1484, -1e+30
      %v1566 = vsel %vm1554, %v1485, -1e+30
      %v1567 = vsel %vm1555, %v1486, -1e+30
      %v1568 = vsel %vm1556, %v1487, -1e+30
      %v1569 = vsel %vm1553, %v1488, -1e+30
      %v1570 = vsel %vm1554, %v1489, -1e+30
      %v1571 = vsel %vm1555, %v1490, -1e+30
      %v1572 = vsel %vm1556, %v1491, -1e+30
      %v1573 = vmax.f32 %v1557, %v1558
      %v1574 = vmax.f32 %v1573, %v1559
      %v1575 = vmax.f32 %v1574, %v1560
      %1576 = vmax.xlane.f32.xlu0 %v1575
      %v1577 = vpop.xlane.xlu0 %1576
      %v1578 = vmax.f32 %v1561, %v1562
      %v1579 = vmax.f32 %v1578, %v1563
      %v1580 = vmax.f32 %v1579, %v1564
      %1581 = vmax.xlane.f32.xlu0 %v1580
      %v1582 = vpop.xlane.xlu0 %1581
      %v1583 = vmax.f32 %v1565, %v1566
      %v1584 = vmax.f32 %v1583, %v1567
      %v1585 = vmax.f32 %v1584, %v1568
      %1586 = vmax.xlane.f32.xlu0 %v1585
      %v1587 = vpop.xlane.xlu0 %1586
      %v1588 = vmax.f32 %v1569, %v1570
      %v1589 = vmax.f32 %v1588, %v1571
      %v1590 = vmax.f32 %v1589, %v1572
      %1591 = vmax.xlane.f32.xlu0 %v1590
      %v1592 = vpop.xlane.xlu0 %1591
      %v1593 = vsub.f32 %v1557, %v1577
      %v1594 = vsub.f32 %v1558, %v1577
      %v1595 = vsub.f32 %v1559, %v1577
      %v1596 = vsub.f32 %v1560, %v1577
      %v1597 = vsub.f32 %v1561, %v1582
      %v1598 = vsub.f32 %v1562, %v1582
      %v1599 = vsub.f32 %v1563, %v1582
      %v1600 = vsub.f32 %v1564, %v1582
      %v1601 = vsub.f32 %v1565, %v1587
      %v1602 = vsub.f32 %v1566, %v1587
      %v1603 = vsub.f32 %v1567, %v1587
      %v1604 = vsub.f32 %v1568, %v1587
      %v1605 = vsub.f32 %v1569, %v1592
      %v1606 = vsub.f32 %v1570, %v1592
      %v1607 = vsub.f32 %v1571, %v1592
      %v1608 = vsub.f32 %v1572, %v1592
      %v1609 = vmul.f32 %v1593, 1.442695
      %v1610 = vpow.pop %v1609
      %v1611 = vmul.f32 %v1594, 1.442695
      %v1612 = vpow.pop %v1611
      %v1613 = vmul.f32 %v1595, 1.442695
      %v1614 = vpow.pop %v1613
      %v1615 = vmul.f32 %v1596, 1.442695
      %v1616 = vpow.pop %v1615
      %v1617 = vmul.f32 %v1597, 1.442695
      %v1618 = vpow.pop %v1617
      %v1619 = vmul.f32 %v1598, 1.442695
      %v1620 = vpow.pop %v1619
      %v1621 = vmul.f32 %v1599, 1.442695
      %v1622 = vpow.pop %v1621
      %v1623 = vmul.f32 %v1600, 1.442695
      %v1624 = vpow.pop %v1623
      %v1625 = vmul.f32 %v1601, 1.442695
      %v1626 = vpow.pop %v1625
      %v1627 = vmul.f32 %v1602, 1.442695
      %v1628 = vpow.pop %v1627
      %v1629 = vmul.f32 %v1603, 1.442695
      %v1630 = vpow.pop %v1629
      %v1631 = vmul.f32 %v1604, 1.442695
      %v1632 = vpow.pop %v1631
      %v1633 = vmul.f32 %v1605, 1.442695
      %v1634 = vpow.pop %v1633
      %v1635 = vmul.f32 %v1606, 1.442695
      %v1636 = vpow.pop %v1635
      %v1637 = vmul.f32 %v1607, 1.442695
      %v1638 = vpow.pop %v1637
      %v1639 = vmul.f32 %v1608, 1.442695
      %v1640 = vpow.pop %v1639
      %v1641 = vld [vmem:[%s17] sm:$0xff]
      %v1642 = vld [vmem:[%s17 + $0x8] sm:$0xff]
      %v1643 = vld [vmem:[%s17 + $0x10] sm:$0xff]
      %v1644 = vld [vmem:[%s17 + $0x18] sm:$0xff]
      %v1645 = vld [vmem:[%s17 + $0x20] sm:$0xff]
      %v1646 = vld [vmem:[%s17 + $0x28] sm:$0xff]
      %v1647 = vld [vmem:[%s17 + $0x30] sm:$0xff]
      %v1648 = vld [vmem:[%s17 + $0x38] sm:$0xff]
      %v1649 = vld [vmem:[%s17 + $0x40] sm:$0xff]
      %v1650 = vld [vmem:[%s17 + $0x48] sm:$0xff]
      %v1651 = vld [vmem:[%s17 + $0x50] sm:$0xff]
      %v1652 = vld [vmem:[%s17 + $0x58] sm:$0xff]
      %v1653 = vld [vmem:[%s17 + $0x60] sm:$0xff]
      %v1654 = vld [vmem:[%s17 + $0x68] sm:$0xff]
      %v1655 = vld [vmem:[%s17 + $0x70] sm:$0xff]
      %v1656 = vld [vmem:[%s17 + $0x78] sm:$0xff]
      %v1657 = vld [vmem:[%s17 + $0x80] sm:$0xff]
      %v1658 = vld [vmem:[%s17 + $0x88] sm:$0xff]
      %v1659 = vld [vmem:[%s17 + $0x90] sm:$0xff]
      %v1660 = vld [vmem:[%s17 + $0x98] sm:$0xff]
      %v1661 = vld [vmem:[%s17 + $0xa0] sm:$0xff]
      %v1662 = vld [vmem:[%s17 + $0xa8] sm:$0xff]
      %v1663 = vld [vmem:[%s17 + $0xb0] sm:$0xff]
      %v1664 = vld [vmem:[%s17 + $0xb8] sm:$0xff]
      %v1665 = vld [vmem:[%s17 + $0xc0] sm:$0xff]
      %v1666 = vld [vmem:[%s17 + $0xc8] sm:$0xff]
      %v1667 = vld [vmem:[%s17 + $0xd0] sm:$0xff]
      %v1668 = vld [vmem:[%s17 + $0xd8] sm:$0xff]
      %v1669 = vld [vmem:[%s17 + $0xe0] sm:$0xff]
      %v1670 = vld [vmem:[%s17 + $0xe8] sm:$0xff]
      %v1671 = vld [vmem:[%s17 + $0xf0] sm:$0xff]
      %v1672 = vld [vmem:[%s17 + $0xf8] sm:$0xff]
      %v1673 = vld [vmem:[%s17 + $0x100] sm:$0xff]
      %v1674 = vld [vmem:[%s17 + $0x108] sm:$0xff]
      %v1675 = vld [vmem:[%s17 + $0x110] sm:$0xff]
      %v1676 = vld [vmem:[%s17 + $0x118] sm:$0xff]
      %v1677 = vld [vmem:[%s17 + $0x120] sm:$0xff]
      %v1678 = vld [vmem:[%s17 + $0x128] sm:$0xff]
      %v1679 = vld [vmem:[%s17 + $0x130] sm:$0xff]
      %v1680 = vld [vmem:[%s17 + $0x138] sm:$0xff]
      %v1681 = vld [vmem:[%s17 + $0x140] sm:$0xff]
      %v1682 = vld [vmem:[%s17 + $0x148] sm:$0xff]
      %v1683 = vld [vmem:[%s17 + $0x150] sm:$0xff]
      %v1684 = vld [vmem:[%s17 + $0x158] sm:$0xff]
      %v1685 = vld [vmem:[%s17 + $0x160] sm:$0xff]
      %v1686 = vld [vmem:[%s17 + $0x168] sm:$0xff]
      %v1687 = vld [vmem:[%s17 + $0x170] sm:$0xff]
      %v1688 = vld [vmem:[%s17 + $0x178] sm:$0xff]
      %v1689 = vld [vmem:[%s17 + $0x180] sm:$0xff]
      %v1690 = vld [vmem:[%s17 + $0x188] sm:$0xff]
      %v1691 = vld [vmem:[%s17 + $0x190] sm:$0xff]
      %v1692 = vld [vmem:[%s17 + $0x198] sm:$0xff]
      %v1693 = vld [vmem:[%s17 + $0x1a0] sm:$0xff]
      %v1694 = vld [vmem:[%s17 + $0x1a8] sm:$0xff]
      %v1695 = vld [vmem:[%s17 + $0x1b0] sm:$0xff]
      %v1696 = vld [vmem:[%s17 + $0x1b8] sm:$0xff]
      %v1697 = vld [vmem:[%s17 + $0x1c0] sm:$0xff]
      %v1698 = vld [vmem:[%s17 + $0x1c8] sm:$0xff]
      %v1699 = vld [vmem:[%s17 + $0x1d0] sm:$0xff]
      %v1700 = vld [vmem:[%s17 + $0x1d8] sm:$0xff]
      %v1701 = vld [vmem:[%s17 + $0x1e0] sm:$0xff]
      %v1702 = vld [vmem:[%s17 + $0x1e8] sm:$0xff]
      %v1703 = vld [vmem:[%s17 + $0x1f0] sm:$0xff]
      %v1704 = vld [vmem:[%s17 + $0x1f8] sm:$0xff]
      %1705 = vmatprep.subr.mxu0 0.0
      %1706 = vmatpush1.msra.mxu0 %v1656
      %1707 = vmatprep.subr.mxu0 0.0
      %1708 = vmatpush1.msra.mxu0 %v1655
      %1709 = vmatprep.subr.mxu0 0.0
      %1710 = vmatpush1.msra.mxu0 %v1654
      %1711 = vmatprep.subr.mxu0 0.0
      %1712 = vmatpush1.msra.mxu0 %v1653
      %1713 = vmatprep.subr.mxu0 0.0
      %1714 = vmatpush1.msra.mxu0 %v1652
      %1715 = vmatprep.subr.mxu0 0.0
      %1716 = vmatpush1.msra.mxu0 %v1651
      %1717 = vmatprep.subr.mxu0 0.0
      %1718 = vmatpush1.msra.mxu0 %v1650
      %1719 = vmatprep.subr.mxu0 0.0
      %1720 = vmatpush1.msra.mxu0 %v1649
      %1721 = vmatprep.subr.mxu0 0.0
      %1722 = vmatpush1.msra.mxu0 %v1648
      %1723 = vmatprep.subr.mxu0 0.0
      %1724 = vmatpush1.msra.mxu0 %v1647
      %1725 = vmatprep.subr.mxu0 0.0
      %1726 = vmatpush1.msra.mxu0 %v1646
      %1727 = vmatprep.subr.mxu0 0.0
      %1728 = vmatpush1.msra.mxu0 %v1645
      %1729 = vmatprep.subr.mxu0 0.0
      %1730 = vmatpush1.msra.mxu0 %v1644
      %1731 = vmatprep.subr.mxu0 0.0
      %1732 = vmatpush1.msra.mxu0 %v1643
      %1733 = vmatprep.subr.mxu0 0.0
      %1734 = vmatpush1.msra.mxu0 %v1642
      %1735 = vmatprep.subr.mxu0 0.0
      %1736 = vmatpush1.msra.mxu0 %v1641
      %1737 = vmatprep.subr.mxu0 0.0
      %1738 = vmatpush2.msra.mxu0 %v1672
      %1739 = vmatprep.subr.mxu0 0.0
      %1740 = vmatpush2.msra.mxu0 %v1671
      %1741 = vmatprep.subr.mxu0 0.0
      %1742 = vmatpush2.msra.mxu0 %v1670
      %1743 = vmatprep.subr.mxu0 0.0
      %1744 = vmatpush2.msra.mxu0 %v1669
      %1745 = vmatprep.subr.mxu0 0.0
      %1746 = vmatpush2.msra.mxu0 %v1668
      %1747 = vmatprep.subr.mxu0 0.0
      %1748 = vmatpush2.msra.mxu0 %v1667
      %1749 = vmatprep.subr.mxu0 0.0
      %1750 = vmatpush2.msra.mxu0 %v1666
      %1751 = vmatprep.subr.mxu0 0.0
      %1752 = vmatpush2.msra.mxu0 %v1665
      %1753 = vmatprep.subr.mxu0 0.0
      %1754 = vmatpush2.msra.mxu0 %v1664
      %1755 = vmatprep.subr.mxu0 0.0
      %1756 = vmatpush2.msra.mxu0 %v1663
      %1757 = vmatprep.subr.mxu0 0.0
      %1758 = vmatpush2.msra.mxu0 %v1662
      %1759 = vmatprep.subr.mxu0 0.0
      %1760 = vmatpush2.msra.mxu0 %v1661
      %1761 = vmatprep.subr.mxu0 0.0
      %1762 = vmatpush2.msra.mxu0 %v1660
      %1763 = vmatprep.subr.mxu0 0.0
      %1764 = vmatpush2.msra.mxu0 %v1659
      %1765 = vmatprep.subr.mxu0 0.0
      %1766 = vmatpush2.msra.mxu0 %v1658
      %1767 = vmatprep.subr.mxu0 0.0
      %1768 = vmatpush2.msra.mxu0 %v1657
      %1769 = vmatprep.mubr.f32.mxu0 %v1612
      %1770 = vmatmul.mubr.f32.gmra.mxu0 %v1610
      %v1771 = vpop.f32.mrf.mxu0
      %v1772 = vadd.f32 0.0, %v1771
      %v1773 = vpop.f32.mrf.mxu0
      %1774 = vmatprep.mubr.f32.mxu0 %v1620
      %1775 = vmatmul.mubr.f32.gmra.mxu0 %v1618
      %v1776 = vpop.f32.mrf.mxu0
      %v1777 = vadd.f32 0.0, %v1776
      %v1778 = vpop.f32.mrf.mxu0
      %1779 = vmatprep.mubr.f32.mxu0 %v1628
      %1780 = vmatmul.mubr.f32.gmra.mxu0 %v1626
      %v1781 = vpop.f32.mrf.mxu0
      %v1782 = vadd.f32 0.0, %v1781
      %v1783 = vpop.f32.mrf.mxu0
      %1784 = vmatprep.mubr.f32.mxu0 %v1636
      %1785 = vmatmul.mubr.f32.gmra.mxu0 %v1634
      %v1786 = vpop.f32.mrf.mxu0
      %v1787 = vadd.f32 0.0, %v1786
      %v1788 = vpop.f32.mrf.mxu0
      %1789 = vdwg.mxu0
      %1790 = vmatprep.subr.mxu0 0.0
      %1791 = vmatpush1.msra.mxu0 %v1688
      %1792 = vmatprep.subr.mxu0 0.0
      %1793 = vmatpush1.msra.mxu0 %v1687
      %1794 = vmatprep.subr.mxu0 0.0
      %1795 = vmatpush1.msra.mxu0 %v1686
      %1796 = vmatprep.subr.mxu0 0.0
      %1797 = vmatpush1.msra.mxu0 %v1685
      %1798 = vmatprep.subr.mxu0 0.0
      %1799 = vmatpush1.msra.mxu0 %v1684
      %1800 = vmatprep.subr.mxu0 0.0
      %1801 = vmatpush1.msra.mxu0 %v1683
      %1802 = vmatprep.subr.mxu0 0.0
      %1803 = vmatpush1.msra.mxu0 %v1682
      %1804 = vmatprep.subr.mxu0 0.0
      %1805 = vmatpush1.msra.mxu0 %v1681
      %1806 = vmatprep.subr.mxu0 0.0
      %1807 = vmatpush1.msra.mxu0 %v1680
      %1808 = vmatprep.subr.mxu0 0.0
      %1809 = vmatpush1.msra.mxu0 %v1679
      %1810 = vmatprep.subr.mxu0 0.0
      %1811 = vmatpush1.msra.mxu0 %v1678
      %1812 = vmatprep.subr.mxu0 0.0
      %1813 = vmatpush1.msra.mxu0 %v1677
      %1814 = vmatprep.subr.mxu0 0.0
      %1815 = vmatpush1.msra.mxu0 %v1676
      %1816 = vmatprep.subr.mxu0 0.0
      %1817 = vmatpush1.msra.mxu0 %v1675
      %1818 = vmatprep.subr.mxu0 0.0
      %1819 = vmatpush1.msra.mxu0 %v1674
      %1820 = vmatprep.subr.mxu0 0.0
      %1821 = vmatpush1.msra.mxu0 %v1673
      %1822 = vmatprep.subr.mxu0 0.0
      %1823 = vmatpush2.msra.mxu0 %v1704
      %1824 = vmatprep.subr.mxu0 0.0
      %1825 = vmatpush2.msra.mxu0 %v1703
      %1826 = vmatprep.subr.mxu0 0.0
      %1827 = vmatpush2.msra.mxu0 %v1702
      %1828 = vmatprep.subr.mxu0 0.0
      %1829 = vmatpush2.msra.mxu0 %v1701
      %1830 = vmatprep.subr.mxu0 0.0
      %1831 = vmatpush2.msra.mxu0 %v1700
      %1832 = vmatprep.subr.mxu0 0.0
      %1833 = vmatpush2.msra.mxu0 %v1699
      %1834 = vmatprep.subr.mxu0 0.0
      %1835 = vmatpush2.msra.mxu0 %v1698
      %1836 = vmatprep.subr.mxu0 0.0
      %1837 = vmatpush2.msra.mxu0 %v1697
      %1838 = vmatprep.subr.mxu0 0.0
      %1839 = vmatpush2.msra.mxu0 %v1696
      %1840 = vmatprep.subr.mxu0 0.0
      %1841 = vmatpush2.msra.mxu0 %v1695
      %1842 = vmatprep.subr.mxu0 0.0
      %1843 = vmatpush2.msra.mxu0 %v1694
      %1844 = vmatprep.subr.mxu0 0.0
      %1845 = vmatpush2.msra.mxu0 %v1693
      %1846 = vmatprep.subr.mxu0 0.0
      %1847 = vmatpush2.msra.mxu0 %v1692
      %1848 = vmatprep.subr.mxu0 0.0
      %1849 = vmatpush2.msra.mxu0 %v1691
      %1850 = vmatprep.subr.mxu0 0.0
      %1851 = vmatpush2.msra.mxu0 %v1690
      %1852 = vmatprep.subr.mxu0 0.0
      %1853 = vmatpush2.msra.mxu0 %v1689
      %1854 = vmatprep.mubr.f32.mxu0 %v1616
      %1855 = vmatmul.mubr.f32.gmra.mxu0 %v1614
      %v1856 = vpop.f32.mrf.mxu0
      %v1857 = vadd.f32 %v1772, %v1856
      %v1858 = vpop.f32.mrf.mxu0
      %1859 = vmatprep.mubr.f32.mxu0 %v1624
      %1860 = vmatmul.mubr.f32.gmra.mxu0 %v1622
      %v1861 = vpop.f32.mrf.mxu0
      %v1862 = vadd.f32 %v1777, %v1861
      %v1863 = vpop.f32.mrf.mxu0
      %1864 = vmatprep.mubr.f32.mxu0 %v1632
      %1865 = vmatmul.mubr.f32.gmra.mxu0 %v1630
      %v1866 = vpop.f32.mrf.mxu0
      %v1867 = vadd.f32 %v1782, %v1866
      %v1868 = vpop.f32.mrf.mxu0
      %1869 = vmatprep.mubr.f32.mxu0 %v1640
      %1870 = vmatmul.mubr.f32.gmra.mxu0 %v1638
      %v1871 = vpop.f32.mrf.mxu0
      %v1872 = vadd.f32 %v1787, %v1871
      %v1873 = vpop.f32.mrf.mxu0
      %1874 = vdwg.mxu0
      %v1875 = vld [vmem:[%s18] sm:$0xff]
      %v1876 = vld [vmem:[%s18 + $0x8] sm:$0xff]
      %v1877 = vld [vmem:[%s18 + $0x10] sm:$0xff]
      %v1878 = vld [vmem:[%s18 + $0x18] sm:$0xff]
      %v1879 = vld [vmem:[%s18 + $0x20] sm:$0xff]
      %v1880 = vld [vmem:[%s18 + $0x28] sm:$0xff]
      %v1881 = vld [vmem:[%s18 + $0x30] sm:$0xff]
      %v1882 = vld [vmem:[%s18 + $0x38] sm:$0xff]
      %v1883 = vld [vmem:[%s18 + $0x40] sm:$0xff]
      %v1884 = vld [vmem:[%s18 + $0x48] sm:$0xff]
      %v1885 = vld [vmem:[%s18 + $0x50] sm:$0xff]
      %v1886 = vld [vmem:[%s18 + $0x58] sm:$0xff]
      %v1887 = vld [vmem:[%s18 + $0x60] sm:$0xff]
      %v1888 = vld [vmem:[%s18 + $0x68] sm:$0xff]
      %v1889 = vld [vmem:[%s18 + $0x70] sm:$0xff]
      %v1890 = vld [vmem:[%s18 + $0x78] sm:$0xff]
      %v1891 = vld [vmem:[%s18 + $0x80] sm:$0xff]
      %v1892 = vld [vmem:[%s18 + $0x88] sm:$0xff]
      %v1893 = vld [vmem:[%s18 + $0x90] sm:$0xff]
      %v1894 = vld [vmem:[%s18 + $0x98] sm:$0xff]
      %v1895 = vld [vmem:[%s18 + $0xa0] sm:$0xff]
      %v1896 = vld [vmem:[%s18 + $0xa8] sm:$0xff]
      %v1897 = vld [vmem:[%s18 + $0xb0] sm:$0xff]
      %v1898 = vld [vmem:[%s18 + $0xb8] sm:$0xff]
      %v1899 = vld [vmem:[%s18 + $0xc0] sm:$0xff]
      %v1900 = vld [vmem:[%s18 + $0xc8] sm:$0xff]
      %v1901 = vld [vmem:[%s18 + $0xd0] sm:$0xff]
      %v1902 = vld [vmem:[%s18 + $0xd8] sm:$0xff]
      %v1903 = vld [vmem:[%s18 + $0xe0] sm:$0xff]
      %v1904 = vld [vmem:[%s18 + $0xe8] sm:$0xff]
      %v1905 = vld [vmem:[%s18 + $0xf0] sm:$0xff]
      %v1906 = vld [vmem:[%s18 + $0xf8] sm:$0xff]
      %v1907 = vld [vmem:[%s18 + $0x100] sm:$0xff]
      %v1908 = vld [vmem:[%s18 + $0x108] sm:$0xff]
      %v1909 = vld [vmem:[%s18 + $0x110] sm:$0xff]
      %v1910 = vld [vmem:[%s18 + $0x118] sm:$0xff]
      %v1911 = vld [vmem:[%s18 + $0x120] sm:$0xff]
      %v1912 = vld [vmem:[%s18 + $0x128] sm:$0xff]
      %v1913 = vld [vmem:[%s18 + $0x130] sm:$0xff]
      %v1914 = vld [vmem:[%s18 + $0x138] sm:$0xff]
      %v1915 = vld [vmem:[%s18 + $0x140] sm:$0xff]
      %v1916 = vld [vmem:[%s18 + $0x148] sm:$0xff]
      %v1917 = vld [vmem:[%s18 + $0x150] sm:$0xff]
      %v1918 = vld [vmem:[%s18 + $0x158] sm:$0xff]
      %v1919 = vld [vmem:[%s18 + $0x160] sm:$0xff]
      %v1920 = vld [vmem:[%s18 + $0x168] sm:$0xff]
      %v1921 = vld [vmem:[%s18 + $0x170] sm:$0xff]
      %v1922 = vld [vmem:[%s18 + $0x178] sm:$0xff]
      %v1923 = vld [vmem:[%s18 + $0x180] sm:$0xff]
      %v1924 = vld [vmem:[%s18 + $0x188] sm:$0xff]
      %v1925 = vld [vmem:[%s18 + $0x190] sm:$0xff]
      %v1926 = vld [vmem:[%s18 + $0x198] sm:$0xff]
      %v1927 = vld [vmem:[%s18 + $0x1a0] sm:$0xff]
      %v1928 = vld [vmem:[%s18 + $0x1a8] sm:$0xff]
      %v1929 = vld [vmem:[%s18 + $0x1b0] sm:$0xff]
      %v1930 = vld [vmem:[%s18 + $0x1b8] sm:$0xff]
      %v1931 = vld [vmem:[%s18 + $0x1c0] sm:$0xff]
      %v1932 = vld [vmem:[%s18 + $0x1c8] sm:$0xff]
      %v1933 = vld [vmem:[%s18 + $0x1d0] sm:$0xff]
      %v1934 = vld [vmem:[%s18 + $0x1d8] sm:$0xff]
      %v1935 = vld [vmem:[%s18 + $0x1e0] sm:$0xff]
      %v1936 = vld [vmem:[%s18 + $0x1e8] sm:$0xff]
      %v1937 = vld [vmem:[%s18 + $0x1f0] sm:$0xff]
      %v1938 = vld [vmem:[%s18 + $0x1f8] sm:$0xff]
      %1939 = vmatprep.subr.mxu0 0.0
      %1940 = vmatpush1.msra.mxu0 %v1890
      %1941 = vmatprep.subr.mxu0 0.0
      %1942 = vmatpush1.msra.mxu0 %v1889
      %1943 = vmatprep.subr.mxu0 0.0
      %1944 = vmatpush1.msra.mxu0 %v1888
      %1945 = vmatprep.subr.mxu0 0.0
      %1946 = vmatpush1.msra.mxu0 %v1887
      %1947 = vmatprep.subr.mxu0 0.0
      %1948 = vmatpush1.msra.mxu0 %v1886
      %1949 = vmatprep.subr.mxu0 0.0
      %1950 = vmatpush1.msra.mxu0 %v1885
      %1951 = vmatprep.subr.mxu0 0.0
      %1952 = vmatpush1.msra.mxu0 %v1884
      %1953 = vmatprep.subr.mxu0 0.0
      %1954 = vmatpush1.msra.mxu0 %v1883
      %1955 = vmatprep.subr.mxu0 0.0
      %1956 = vmatpush1.msra.mxu0 %v1882
      %1957 = vmatprep.subr.mxu0 0.0
      %1958 = vmatpush1.msra.mxu0 %v1881
      %1959 = vmatprep.subr.mxu0 0.0
      %1960 = vmatpush1.msra.mxu0 %v1880
      %1961 = vmatprep.subr.mxu0 0.0
      %1962 = vmatpush1.msra.mxu0 %v1879
      %1963 = vmatprep.subr.mxu0 0.0
      %1964 = vmatpush1.msra.mxu0 %v1878
      %1965 = vmatprep.subr.mxu0 0.0
      %1966 = vmatpush1.msra.mxu0 %v1877
      %1967 = vmatprep.subr.mxu0 0.0
      %1968 = vmatpush1.msra.mxu0 %v1876
      %1969 = vmatprep.subr.mxu0 0.0
      %1970 = vmatpush1.msra.mxu0 %v1875
      %1971 = vmatprep.subr.mxu0 0.0
      %1972 = vmatpush2.msra.mxu0 %v1906
      %1973 = vmatprep.subr.mxu0 0.0
      %1974 = vmatpush2.msra.mxu0 %v1905
      %1975 = vmatprep.subr.mxu0 0.0
      %1976 = vmatpush2.msra.mxu0 %v1904
      %1977 = vmatprep.subr.mxu0 0.0
      %1978 = vmatpush2.msra.mxu0 %v1903
      %1979 = vmatprep.subr.mxu0 0.0
      %1980 = vmatpush2.msra.mxu0 %v1902
      %1981 = vmatprep.subr.mxu0 0.0
      %1982 = vmatpush2.msra.mxu0 %v1901
      %1983 = vmatprep.subr.mxu0 0.0
      %1984 = vmatpush2.msra.mxu0 %v1900
      %1985 = vmatprep.subr.mxu0 0.0
      %1986 = vmatpush2.msra.mxu0 %v1899
      %1987 = vmatprep.subr.mxu0 0.0
      %1988 = vmatpush2.msra.mxu0 %v1898
      %1989 = vmatprep.subr.mxu0 0.0
      %1990 = vmatpush2.msra.mxu0 %v1897
      %1991 = vmatprep.subr.mxu0 0.0
      %1992 = vmatpush2.msra.mxu0 %v1896
      %1993 = vmatprep.subr.mxu0 0.0
      %1994 = vmatpush2.msra.mxu0 %v1895
      %1995 = vmatprep.subr.mxu0 0.0
      %1996 = vmatpush2.msra.mxu0 %v1894
      %1997 = vmatprep.subr.mxu0 0.0
      %1998 = vmatpush2.msra.mxu0 %v1893
      %1999 = vmatprep.subr.mxu0 0.0
      %2000 = vmatpush2.msra.mxu0 %v1892
      %2001 = vmatprep.subr.mxu0 0.0
      %2002 = vmatpush2.msra.mxu0 %v1891
      %2003 = vmatprep.mubr.f32.mxu0 %v1612
      %2004 = vmatmul.mubr.f32.gmra.mxu0 %v1610
      %v2005 = vpop.f32.mrf.mxu0
      %v2006 = vadd.f32 0.0, %v2005
      %v2007 = vpop.f32.mrf.mxu0
      %2008 = vmatprep.mubr.f32.mxu0 %v1620
      %2009 = vmatmul.mubr.f32.gmra.mxu0 %v1618
      %v2010 = vpop.f32.mrf.mxu0
      %v2011 = vadd.f32 0.0, %v2010
      %v2012 = vpop.f32.mrf.mxu0
      %2013 = vmatprep.mubr.f32.mxu0 %v1628
      %2014 = vmatmul.mubr.f32.gmra.mxu0 %v1626
      %v2015 = vpop.f32.mrf.mxu0
      %v2016 = vadd.f32 0.0, %v2015
      %v2017 = vpop.f32.mrf.mxu0
      %2018 = vmatprep.mubr.f32.mxu0 %v1636
      %2019 = vmatmul.mubr.f32.gmra.mxu0 %v1634
      %v2020 = vpop.f32.mrf.mxu0
      %v2021 = vadd.f32 0.0, %v2020
      %v2022 = vpop.f32.mrf.mxu0
      %2023 = vdwg.mxu0
      %2024 = vmatprep.subr.mxu0 0.0
      %2025 = vmatpush1.msra.mxu0 %v1922
      %2026 = vmatprep.subr.mxu0 0.0
      %2027 = vmatpush1.msra.mxu0 %v1921
      %2028 = vmatprep.subr.mxu0 0.0
      %2029 = vmatpush1.msra.mxu0 %v1920
      %2030 = vmatprep.subr.mxu0 0.0
      %2031 = vmatpush1.msra.mxu0 %v1919
      %2032 = vmatprep.subr.mxu0 0.0
      %2033 = vmatpush1.msra.mxu0 %v1918
      %2034 = vmatprep.subr.mxu0 0.0
      %2035 = vmatpush1.msra.mxu0 %v1917
      %2036 = vmatprep.subr.mxu0 0.0
      %2037 = vmatpush1.msra.mxu0 %v1916
      %2038 = vmatprep.subr.mxu0 0.0
      %2039 = vmatpush1.msra.mxu0 %v1915
      %2040 = vmatprep.subr.mxu0 0.0
      %2041 = vmatpush1.msra.mxu0 %v1914
      %2042 = vmatprep.subr.mxu0 0.0
      %2043 = vmatpush1.msra.mxu0 %v1913
      %2044 = vmatprep.subr.mxu0 0.0
      %2045 = vmatpush1.msra.mxu0 %v1912
      %2046 = vmatprep.subr.mxu0 0.0
      %2047 = vmatpush1.msra.mxu0 %v1911
      %2048 = vmatprep.subr.mxu0 0.0
      %2049 = vmatpush1.msra.mxu0 %v1910
      %2050 = vmatprep.subr.mxu0 0.0
      %2051 = vmatpush1.msra.mxu0 %v1909
      %2052 = vmatprep.subr.mxu0 0.0
      %2053 = vmatpush1.msra.mxu0 %v1908
      %2054 = vmatprep.subr.mxu0 0.0
      %2055 = vmatpush1.msra.mxu0 %v1907
      %2056 = vmatprep.subr.mxu0 0.0
      %2057 = vmatpush2.msra.mxu0 %v1938
      %2058 = vmatprep.subr.mxu0 0.0
      %2059 = vmatpush2.msra.mxu0 %v1937
      %2060 = vmatprep.subr.mxu0 0.0
      %2061 = vmatpush2.msra.mxu0 %v1936
      %2062 = vmatprep.subr.mxu0 0.0
      %2063 = vmatpush2.msra.mxu0 %v1935
      %2064 = vmatprep.subr.mxu0 0.0
      %2065 = vmatpush2.msra.mxu0 %v1934
      %2066 = vmatprep.subr.mxu0 0.0
      %2067 = vmatpush2.msra.mxu0 %v1933
      %2068 = vmatprep.subr.mxu0 0.0
      %2069 = vmatpush2.msra.mxu0 %v1932
      %2070 = vmatprep.subr.mxu0 0.0
      %2071 = vmatpush2.msra.mxu0 %v1931
      %2072 = vmatprep.subr.mxu0 0.0
      %2073 = vmatpush2.msra.mxu0 %v1930
      %2074 = vmatprep.subr.mxu0 0.0
      %2075 = vmatpush2.msra.mxu0 %v1929
      %2076 = vmatprep.subr.mxu0 0.0
      %2077 = vmatpush2.msra.mxu0 %v1928
      %2078 = vmatprep.subr.mxu0 0.0
      %2079 = vmatpush2.msra.mxu0 %v1927
      %2080 = vmatprep.subr.mxu0 0.0
      %2081 = vmatpush2.msra.mxu0 %v1926
      %2082 = vmatprep.subr.mxu0 0.0
      %2083 = vmatpush2.msra.mxu0 %v1925
      %2084 = vmatprep.subr.mxu0 0.0
      %2085 = vmatpush2.msra.mxu0 %v1924
      %2086 = vmatprep.subr.mxu0 0.0
      %2087 = vmatpush2.msra.mxu0 %v1923
      %2088 = vmatprep.mubr.f32.mxu0 %v1616
      %2089 = vmatmul.mubr.f32.gmra.mxu0 %v1614
      %v2090 = vpop.f32.mrf.mxu0
      %v2091 = vadd.f32 %v2006, %v2090
      %v2092 = vpop.f32.mrf.mxu0
      %2093 = vmatprep.mubr.f32.mxu0 %v1624
      %2094 = vmatmul.mubr.f32.gmra.mxu0 %v1622
      %v2095 = vpop.f32.mrf.mxu0
      %v2096 = vadd.f32 %v2011, %v2095
      %v2097 = vpop.f32.mrf.mxu0
      %2098 = vmatprep.mubr.f32.mxu0 %v1632
      %2099 = vmatmul.mubr.f32.gmra.mxu0 %v1630
      %v2100 = vpop.f32.mrf.mxu0
      %v2101 = vadd.f32 %v2016, %v2100
      %v2102 = vpop.f32.mrf.mxu0
      %2103 = vmatprep.mubr.f32.mxu0 %v1640
      %2104 = vmatmul.mubr.f32.gmra.mxu0 %v1638
      %v2105 = vpop.f32.mrf.mxu0
      %v2106 = vadd.f32 %v2021, %v2105
      %v2107 = vpop.f32.mrf.mxu0
      %2108 = vdwg.mxu0
      %v2109 = vrcp.pop %v2091
      %v2110 = vrcp.pop %v2096
      %v2111 = vrcp.pop %v2101
      %v2112 = vrcp.pop %v2106
      %v2113 = vmul.f32 %v1857, %v2109
      %v2114 = vmul.f32 %v1862, %v2110
      %v2115 = vmul.f32 %v1867, %v2111
      %v2116 = vmul.f32 %v1872, %v2112
      %vm2117 = vcmask 31744
      %2118 = vst.msk [vmem:[%s604] sm:$0xff] %vm2117, %v2113
      %2119 = vst.msk [vmem:[%s604 + $0x8] sm:$0xff] %vm2117, %v2114
      %2120 = vst.msk [vmem:[%s604 + $0x10] sm:$0xff] %vm2117, %v2115
      %2121 = vst.msk [vmem:[%s604 + $0x18] sm:$0xff] %vm2117, %v2116
      %s2122 = smul.u32 4, %s30
      %p2123 = scmp.lt.s32.totalorder %s2122, 7
      %s2124 = scalar_select %p2123, %s2122, 7
      %s2125 = smul.addr %s2124, 8
      %s2126 = scalar_lea.vmem %s19, %s2125
      // Predicated region
      $region97: #{evolvable_mlp_forward.1} parent=95 // pred_check
        %p2127 = pneg %p452
      $region98: #{evolvable_mlp_forward.1} parent=95 // pred_check_branch
        %2129 = sbr.rel (%p2127) target = $region100
      $region99: #{evolvable_mlp_forward.1} parent=95 // pred_region
        %s2130 = smul.u32 4, %s30
      $region100: #{evolvable_mlp_forward.1} parent=95 // pred_fallthru
        _
    $region96: #{evolvable_mlp_forward.1} parent=5 // pred_fallthru
      _
    %p2131 = scmp.le.s32.totalorder 2, %s25
    // Predicated region
    $region101: #{evolvable_mlp_forward.1} parent=5 // pred_check
      %p2132 = pneg %p2131
    $region102: #{evolvable_mlp_forward.1} parent=5 // pred_check_branch
      %2134 = sbr.rel (%p2132) target = $region104
    $region103: #{evolvable_mlp_forward.1} parent=5 // pred_region
      %s2135 = ssub.s32 %s25, 2
      // Predicated region
      $region105: #{evolvable_mlp_forward.1} parent=103 // pred_check
        %p2136 = pneg %p458
      $region106: #{evolvable_mlp_forward.1} parent=103 // pred_check_branch
        %2138 = sbr.rel (%p2136) target = $region108
      $region107: #{evolvable_mlp_forward.1} parent=103 // pred_region
        %s2139 = smul.u32 4, %s31
        %p2140 = scmp.lt.s32.totalorder %s2139, 7
        %s2141 = scalar_select %p2140, %s2139, 7
        %s2142 = smul.addr %s2141, 8
        %s2143 = scalar_lea.vmem %s19, %s2142
      $region108: #{evolvable_mlp_forward.1} parent=103 // pred_fallthru
        _
    $region104: #{evolvable_mlp_forward.1} parent=5 // pred_fallthru
      _
  $region6: #{evolvable_mlp_forward.1} parent=0 // loop_footer
    %s29 = sadd.s32 1, %s25
  $region7: #{evolvable_mlp_forward.1} parent=0 // loop_footer_branch
    %24 = sbr.rel target = $region3
  $region8: #{evolvable_mlp_forward.1} parent=0 // loop_exit
    _

</llo_original>
